<compile_context>
chip_gen: v5e
topology: v5e:2x2
jax: 0.10.0
libtpu: 0.0.40
codegen_flags: <defaults>
</compile_context>

<pallas_src>
import functools

import numpy as np

import jax
import jax.numpy as jnp
from jax.experimental import pallas as pl
from jax.experimental.pallas import tpu as pltpu

_LANE = 128
_SUBLANE = 8

# Per-step schedule flag bits.
_F_INIT = 1   # first nonzero block of this dst-tile row -> zero the accumulator
_F_FIN = 2    # last nonzero block of this dst-tile row  -> bias + ReLU finalize
_F_ACC = 4    # this step carries a nonzero A block      -> accumulate A @ x
_F_LAST = 8   # last real step of the whole schedule     -> pooled FC (fused layer)


def _round_up(v, m):
    return ((v + m - 1) // m) * m


def _pick_tiles(n):
    """(tm, tk): dst-node tile / src-node tile sizes.

    Small graphs: one lane-dense block (node axis padded to 128).
    Large graphs: tm=1024 amortizes per-step overhead and the once-per-dst-tile
    weight matmuls; tk=512 keeps the block-sparsity granularity finer. Guard keeps
    at least 2 dst tiles so v7x's two TensorCores / megacore both get work.
    """
    np_small = _round_up(max(n, 1), _LANE)
    if np_small <= 1024:
        return np_small, np_small
    tm = 1024
    while (n + tm - 1) // tm < 2 and tm > 256:
        tm //= 2
    tk = min(512, tm)
    return tm, tk


# ---------------------------------------------------------------------------
# Host-side block-CSR schedule (flat nnz-block list + per-step flags)
# ---------------------------------------------------------------------------
def _build_schedule(adj_host, n, tm, tk, n_pad):
    ni = n_pad // tm
    nk = n_pad // tk
    nz = np.zeros((ni, nk), dtype=bool)
    r, c = np.nonzero(np.asarray(adj_host)[:n, :n])
    if r.size:
        nz[r // tm, c // tk] = True

    rows, cols, flags = [], [], []
    for i in range(ni):
        ks = np.nonzero(nz[i])[0]
        if ks.size == 0:
            # Empty dst-tile row: still needs the x_dst @ W_root + bias path.
            rows.append(i)
            cols.append(min(i * (tm // tk), nk - 1))
            flags.append(_F_INIT | _F_FIN)
        else:
            for j, k in enumerate(ks):
                fl = _F_ACC
                if j == 0:
                    fl |= _F_INIT
                if j == ks.size - 1:
                    fl |= _F_FIN
                rows.append(i)
                cols.append(int(k))
                flags.append(fl)
    flags[-1] |= _F_LAST
    nnz_blocks = int(nz.sum())

    # Bucket the grid length (multiple of 8) so jit caches stay warm across batches;
    # padded steps are no-ops that keep pointing at the last real blocks (no DMA).
    n_real = len(rows)
    total = _round_up(n_real, 8)
    rows += [rows[-1]] * (total - n_real)
    cols += [cols[-1]] * (total - n_real)
    flags += [0] * (total - n_real)
    return (np.asarray(rows, np.int32), np.asarray(cols, np.int32),
            np.asarray(flags, np.int32), nnz_blocks)


# ---------------------------------------------------------------------------
# GraphConv layer kernel:  relu( x_dst @ W_root + (sum_k A[i,k] @ x[k]) @ W_rel + b )
# ---------------------------------------------------------------------------
def _graphconv_kernel(n_valid, tm, rows_ref, cols_ref, flags_ref,
                      a_ref, xsrc_ref, xdst_ref, wroot_ref, wrel_ref, b_ref,
                      o_ref, acc_ref):
    s = pl.program_id(0)
    f = flags_ref[s]
    row = rows_ref[s]

    @pl.when((f & _F_INIT) != 0)
    def _init():
        acc_ref[...] = jnp.zeros_like(acc_ref)

    @pl.when((f & _F_ACC) != 0)
    def _accumulate():
        a = a_ref[...].astype(jnp.bfloat16)          # int8 0/1 counts -> bf16 (exact)
        acc_ref[...] += jnp.dot(a, xsrc_ref[...], preferred_element_type=jnp.float32)

    @pl.when((f & _F_FIN) != 0)
    def _finalize():
        agg = acc_ref[...].astype(jnp.bfloat16)
        h = (jnp.dot(xdst_ref[...], wroot_ref[...], preferred_element_type=jnp.float32)
             + jnp.dot(agg, wrel_ref[...], preferred_element_type=jnp.float32)
             + b_ref[...])
        h = jnp.maximum(h, 0.0)
        if n_valid is not None:                      # zero padded dst-node rows
            rid = jax.lax.broadcasted_iota(jnp.int32, h.shape, 0) + row * tm
            h = jnp.where(rid < n_valid, h, 0.0)
        o_ref[...] = h.astype(o_ref.dtype)


def _graphconv(a, x, wroot, wrel, b, rows, cols, flags, nnz_blocks, *,
               tm, tk, n_valid):
    Np, Fp = x.shape
    Hp = wroot.shape[1]
    steps = int(rows.shape[0])

    def a_map(s, rows_ref, cols_ref, flags_ref):
        return (rows_ref[s], cols_ref[s])

    def xsrc_map(s, rows_ref, cols_ref, flags_ref):
        return (cols_ref[s], 0)

    def xdst_map(s, rows_ref, cols_ref, flags_ref):
        return (rows_ref[s], 0)

    def const_map(s, rows_ref, cols_ref, flags_ref):
        return (0, 0)

    flops = 2 * nnz_blocks * tm * tk * Fp + 2 * 2 * Np * Fp * Hp
    bytes_accessed = (nnz_blocks * tm * tk * 1        # int8 A blocks actually streamed
                      + nnz_blocks * tk * Fp * 2      # x re-streamed per touching dst tile
                      + Np * Fp * 2                   # x as dst operand
                      + 2 * wroot.size * 2 + b.size * 4
                      + Np * Hp * 2)                  # bf16 output

    kernel = functools.partial(_graphconv_kernel,
                               n_valid if Np != n_valid else None, tm)

    return pl.pallas_call(
        kernel,
        out_shape=jax.ShapeDtypeStruct((Np, Hp), jnp.bfloat16),
        grid_spec=pltpu.PrefetchScalarGridSpec(
            num_scalar_prefetch=3,
            grid=(steps,),
            in_specs=[
                pl.BlockSpec((tm, tk), a_map),       # int8 adjacency block
                pl.BlockSpec((tk, Fp), xsrc_map),    # src-node features (bf16)
                pl.BlockSpec((tm, Fp), xdst_map),    # dst-node features (resident per row)
                pl.BlockSpec((Fp, Hp), const_map),   # W_root (bf16)
                pl.BlockSpec((Fp, Hp), const_map),   # W_rel  (bf16)
                pl.BlockSpec((1, Hp), const_map),    # bias (f32)
            ],
            out_specs=pl.BlockSpec((tm, Hp), xdst_map),
            scratch_shapes=[pltpu.VMEM((tm, Fp), jnp.float32)],
        ),
        compiler_params=pltpu.CompilerParams(dimension_semantics=("arbitrary",)),
        cost_estimate=pl.CostEstimate(flops=int(flops), transcendentals=0,
                                      bytes_accessed=int(bytes_accessed)),
    )(rows, cols, flags, a, x, x, wroot, wrel, b)


# ---------------------------------------------------------------------------
# Second GraphConv with global_mean_pool + final Linear fused into the finalize:
# h2 never hits HBM; pooled (Gp, Hp) accumulates across dst tiles in VMEM.
# ---------------------------------------------------------------------------
def _graphconv_pool_fc_kernel(rows_ref, cols_ref, flags_ref,
                              a_ref, hsrc_ref, hdst_ref, wroot_ref, wrel_ref, b_ref,
                              pool_ref, wfc_ref, bfc_ref,
                              o_ref, acc_ref, pooled_ref):
    s = pl.program_id(0)
    f = flags_ref[s]

    @pl.when(s == 0)
    def _init_pool():
        pooled_ref[...] = jnp.zeros_like(pooled_ref)

    @pl.when((f & _F_INIT) != 0)
    def _init():
        acc_ref[...] = jnp.zeros_like(acc_ref)

    @pl.when((f & _F_ACC) != 0)
    def _accumulate():
        a = a_ref[...].astype(jnp.bfloat16)
        acc_ref[...] += jnp.dot(a, hsrc_ref[...], preferred_element_type=jnp.float32)

    @pl.when((f & _F_FIN) != 0)
    def _finalize_row():
        agg = acc_ref[...].astype(jnp.bfloat16)
        h = (jnp.dot(hdst_ref[...], wroot_ref[...], preferred_element_type=jnp.float32)
             + jnp.dot(agg, wrel_ref[...], preferred_element_type=jnp.float32)
             + b_ref[...])
        h = jnp.maximum(h, 0.0).astype(jnp.bfloat16)
        # Pool matrix has zero columns for padded nodes -> padded rows contribute 0.
        pooled_ref[...] += jnp.dot(pool_ref[...], h, preferred_element_type=jnp.float32)

    @pl.when((f & _F_LAST) != 0)
    def _final_fc():
        pooled = pooled_ref[...].astype(jnp.bfloat16)
        o_ref[...] = (jnp.dot(pooled, wfc_ref[...], preferred_element_type=jnp.float32)
                      + bfc_ref[...])


def _graphconv_pool_fc(a, h, wroot, wrel, b, pool, wfc, bfc,
                       rows, cols, flags, nnz_blocks, *, tm, tk):
    Np, Fp = h.shape
    Hp = wroot.shape[1]
    Gp = pool.shape[0]
    Cp = wfc.shape[1]
    steps = int(rows.shape[0])

    def a_map(s, r, c, f):
        return (r[s], c[s])

    def src_map(s, r, c, f):
        return (c[s], 0)

    def dst_map(s, r, c, f):
        return (r[s], 0)

    def pool_map(s, r, c, f):
        return (0, r[s])

    def const_map(s, r, c, f):
        return (0, 0)

    flops = (2 * nnz_blocks * tm * tk * Fp + 2 * 2 * Np * Fp * Hp
             + 2 * Np * Gp * Hp + 2 * Gp * Hp * Cp)
    bytes_accessed = (nnz_blocks * tm * tk * 1
                      + nnz_blocks * tk * Fp * 2
                      + Np * Fp * 2
                      + 2 * wroot.size * 2 + b.size * 4
                      + Gp * Np * 2 + wfc.size * 2 + bfc.size * 4
                      + Gp * Cp * 4)

    return pl.pallas_call(
        _graphconv_pool_fc_kernel,
        out_shape=jax.ShapeDtypeStruct((Gp, Cp), jnp.float32),
        grid_spec=pltpu.PrefetchScalarGridSpec(
            num_scalar_prefetch=3,
            grid=(steps,),
            in_specs=[
                pl.BlockSpec((tm, tk), a_map),       # int8 adjacency block
                pl.BlockSpec((tk, Fp), src_map),     # h1 as src features
                pl.BlockSpec((tm, Fp), dst_map),     # h1 as dst features
                pl.BlockSpec((Fp, Hp), const_map),   # W_root
                pl.BlockSpec((Fp, Hp), const_map),   # W_rel
                pl.BlockSpec((1, Hp), const_map),    # bias
                pl.BlockSpec((Gp, tm), pool_map),    # mean-pool slab for this dst tile
                pl.BlockSpec((Hp, Cp), const_map),   # FC weight
                pl.BlockSpec((1, Cp), const_map),    # FC bias
            ],
            out_specs=pl.BlockSpec((Gp, Cp), const_map),
            scratch_shapes=[pltpu.VMEM((tm, Fp), jnp.float32),   # A@h accumulator
                            pltpu.VMEM((Gp, Hp), jnp.float32)],  # pooled accumulator
        ),
        compiler_params=pltpu.CompilerParams(dimension_semantics=("arbitrary",)),
        cost_estimate=pl.CostEstimate(flops=int(flops), transcendentals=0,
                                      bytes_accessed=int(bytes_accessed)),
    )(rows, cols, flags, a, h, h, wroot, wrel, b, pool, wfc, bfc)


# ---------------------------------------------------------------------------
# Forward pass wrapper
# ---------------------------------------------------------------------------
def gnn_classifier_forward(x, adj, pool, params, adj_host=None):
    N, F = x.shape
    G = pool.shape[0]
    H = params["w1_root"].shape[1]
    C = params["wfc"].shape[1]

    tm, tk = _pick_tiles(N)
    Np = _round_up(N, tm)                 # tk divides tm, so Np is tk-aligned too
    Fp = _round_up(F, _LANE)
    Hp = _round_up(H, _LANE)
    Cp = _round_up(C, _LANE)
    Gp = _round_up(G, _SUBLANE)

    def pad2(a, shape, dtype):
        out = jnp.zeros(shape, dtype)
        return out.at[:a.shape[0], :a.shape[1]].set(a.astype(dtype))

    # A holds small integer edge counts -> int8 is exact and halves the HBM A stream.
    a_p = pad2(adj, (Np, Np), jnp.int8)
    x_p = pad2(x, (Np, Fp), jnp.bfloat16)
    pool_p = pad2(pool, (Gp, Np), jnp.bfloat16)

    w1_root = pad2(params["w1_root"], (Fp, Hp), jnp.bfloat16)
    w1_rel = pad2(params["w1_rel"], (Fp, Hp), jnp.bfloat16)
    b1 = pad2(params["b1"], (1, Hp), jnp.float32)
    w2_root = pad2(params["w2_root"], (Hp, Hp), jnp.bfloat16)
    w2_rel = pad2(params["w2_rel"], (Hp, Hp), jnp.bfloat16)
    b2 = pad2(params["b2"], (1, Hp), jnp.float32)
    wfc = pad2(params["wfc"], (Hp, Cp), jnp.bfloat16)
    bfc = pad2(params["bfc"], (1, Cp), jnp.float32)

    if adj_host is None:
        # TODO(synk): in production, build the schedule directly from the host-side
        # COO edge list instead of pulling the device adjacency back to the host.
        adj_host = np.asarray(jax.device_get(adj))
    rows, cols, flags, nnz_blocks = _build_schedule(adj_host, N, tm, tk, Np)

    h1 = _graphconv(a_p, x_p, w1_root, w1_rel, b1, rows, cols, flags, nnz_blocks,
                    tm=tm, tk=tk, n_valid=N)                           # (Np, Hp) bf16
    out = _graphconv_pool_fc(a_p, h1, w2_root, w2_rel, b2, pool_p, wfc, bfc,
                             rows, cols, flags, nnz_blocks, tm=tm, tk=tk)  # (Gp, Cp) f32
    return out[:G, :C]


# ---------------------------------------------------------------------------
# Glue (host numpy): COO edges / batch vector -> dense adjacency + mean-pool matrix
# ---------------------------------------------------------------------------
def _build_graph_arrays(edge_index, batch, num_nodes, num_graphs):
    edge_index = np.asarray(edge_index)
    batch = np.asarray(batch)
    adj = np.zeros((num_nodes, num_nodes), np.float32)
    # add (not set) so multigraph duplicate edges are counted like PyG aggr='add'.
    np.add.at(adj, (edge_index[1], edge_index[0]), 1.0)
    one_hot = (batch[None, :] == np.arange(num_graphs)[:, None]).astype(np.float32)
    counts = one_hot.sum(axis=1, keepdims=True)
    pool = one_hot / np.maximum(counts, 1.0)
    return adj, pool


def _init_params(key, input_dim, hidden_dim, output_dim):
    ks = jax.random.split(key, 7)
    s = 0.1
    return {
        "w1_root": s * jax.random.normal(ks[0], (input_dim, hidden_dim), jnp.float32),
        "w1_rel": s * jax.random.normal(ks[1], (input_dim, hidden_dim), jnp.float32),
        "b1": s * jax.random.normal(ks[2], (1, hidden_dim), jnp.float32),
        "w2_root": s * jax.random.normal(ks[3], (hidden_dim, hidden_dim), jnp.float32),
        "w2_rel": s * jax.random.normal(ks[4], (hidden_dim, hidden_dim), jnp.float32),
        "b2": s * jax.random.normal(ks[5], (1, hidden_dim), jnp.float32),
        "wfc": s * jax.random.normal(ks[6], (hidden_dim, output_dim), jnp.float32),
        "bfc": jnp.zeros((1, output_dim), jnp.float32),
    }


def _reference_forward(x, adj, pool, p):
    """Plain-JAX reference mirroring the kernel's mixed precision
    (bf16 MXU inputs, f32 accumulation, bf16 layer outputs)."""
    bf16, f32 = jnp.bfloat16, jnp.float32
    mm = lambda a, b: jnp.dot(a.astype(bf16), b.astype(bf16), preferred_element_type=f32)
    h1 = jnp.maximum(mm(x, p["w1_root"]) + mm(mm(adj, x), p["w1_rel"]) + p["b1"], 0.0)
    h1 = h1.astype(bf16)
    h2 = jnp.maximum(mm(h1, p["w2_root"]) + mm(mm(adj, h1), p["w2_rel"]) + p["b2"], 0.0)
    h2 = h2.astype(bf16)
    pooled = mm(pool, h2).astype(bf16)
    return mm(pooled, p["wfc"]) + p["bfc"]


if __name__ == "__main__":
    # Small synthetic "jets as graphs" batch: 2 graphs x 8 nodes, 4 input features,
    # hidden=32, 2 output classes.
    num_graphs = 2
    nodes_per_graph = 8
    N = num_graphs * nodes_per_graph
    input_dim, hidden_dim, output_dim = 4, 32, 2

    key = jax.random.PRNGKey(0)
    k_x, k_p = jax.random.split(key)

    x = jax.random.normal(k_x, (N, input_dim), jnp.float32)

    # Bidirectional ring within each graph.
    src_list, dst_list = [], []
    for g in range(num_graphs):
        base = g * nodes_per_graph
        for i in range(nodes_per_graph):
            u, v = base + i, base + (i + 1) % nodes_per_graph
            src_list += [u, v]
            dst_list += [v, u]
    edge_index = np.array([src_list, dst_list], dtype=np.int32)                    # (2, E)
    batch = np.repeat(np.arange(num_graphs, dtype=np.int32), nodes_per_graph)      # (N,)

    adj_host, pool_host = _build_graph_arrays(edge_index, batch, N, num_graphs)
    adj = jnp.asarray(adj_host)
    pool = jnp.asarray(pool_host)
    params = _init_params(k_p, input_dim, hidden_dim, output_dim)

    out = gnn_classifier_forward(x, adj, pool, params, adj_host=adj_host)
    out = jax.block_until_ready(out)

    ref = _reference_forward(x, adj, pool, params)
    assert out.shape == (num_graphs, output_dim)
    assert jnp.allclose(out, ref, atol=5e-3, rtol=5e-3), (out, ref)

    print("KERNEL_OK")
</pallas_src>

<mosaic_0001>
module attributes {stable_mosaic.version = 11 : i64} {
  func.func @_graphconv_kernel(%arg0: i32, %arg1: memref<8xi32, #tpu.memory_space<smem>>, %arg2: memref<8xi32, #tpu.memory_space<smem>>, %arg3: memref<8xi32, #tpu.memory_space<smem>>, %arg4: memref<128x128xi8, #tpu.memory_space<vmem>>, %arg5: memref<128x128xbf16, #tpu.memory_space<vmem>>, %arg6: memref<128x128xbf16, #tpu.memory_space<vmem>>, %arg7: memref<128x128xbf16, #tpu.memory_space<vmem>>, %arg8: memref<128x128xbf16, #tpu.memory_space<vmem>>, %arg9: memref<1x128xf32, #tpu.memory_space<vmem>>, %arg10: memref<128x128xbf16, #tpu.memory_space<vmem>>, %arg11: memref<128x128xf32, #tpu.memory_space<vmem>>) attributes {dimension_semantics = [#tpu.dimension_semantics<arbitrary>], iteration_bounds = array<i64: 8>, scalar_prefetch = 3 : i64, scratch_operands = 1 : i64, tpu.core_type = #tpu.core_type<tc>, window_params = [{transform_indices = @transform_0, window_bounds = array<i64: 128, 128>}, {transform_indices = @transform_1, window_bounds = array<i64: 128, 128>}, {transform_indices = @transform_2, window_bounds = array<i64: 128, 128>}, {pipeline_mode = #tpu.pipeline_mode<synchronous>, transform_indices = @transform_3, window_bounds = array<i64: 128, 128>}, {pipeline_mode = #tpu.pipeline_mode<synchronous>, transform_indices = @transform_4, window_bounds = array<i64: 128, 128>}, {pipeline_mode = #tpu.pipeline_mode<synchronous>, transform_indices = @transform_5, window_bounds = array<i64: 1, 128>}, {transform_indices = @transform_6, window_bounds = array<i64: 128, 128>}]} {
    %0 = arith.index_cast %arg0 : i32 to index
    %1 = memref.load %arg3[%0] : memref<8xi32, #tpu.memory_space<smem>>
    %2 = arith.index_cast %arg0 : i32 to index
    %3 = memref.load %arg1[%2] : memref<8xi32, #tpu.memory_space<smem>>
    %c1_i32 = arith.constant 1 : i32
    %4 = arith.andi %1, %c1_i32 : i32
    %c0_i32 = arith.constant 0 : i32
    %5 = arith.cmpi ne, %4, %c0_i32 : i32
    %6 = arith.extui %5 : i1 to i32
    %c0_i32_0 = arith.constant 0 : i32
    %7 = arith.cmpi ne, %6, %c0_i32_0 : i32
    scf.if %7 {
      %cst = arith.constant 0.000000e+00 : f32
      %16 = vector.broadcast %cst : f32 to vector<128x128xf32>
      %c0 = arith.constant 0 : index
      %c0_5 = arith.constant 0 : index
      %17 = vector.load %arg11[%c0, %c0_5] : memref<128x128xf32, #tpu.memory_space<vmem>>, vector<128x128xf32>
      tpu.vector_store %arg11[%c0, %c0_5], %16 {strides = array<i32>} : memref<128x128xf32, #tpu.memory_space<vmem>>, vector<128x128xf32>,
    } else {
    }
    %c4_i32 = arith.constant 4 : i32
    %8 = arith.andi %1, %c4_i32 : i32
    %c0_i32_1 = arith.constant 0 : i32
    %9 = arith.cmpi ne, %8, %c0_i32_1 : i32
    %10 = arith.extui %9 : i1 to i32
    %c0_i32_2 = arith.constant 0 : i32
    %11 = arith.cmpi ne, %10, %c0_i32_2 : i32
    scf.if %11 {
      %c0 = arith.constant 0 : index
      %c0_5 = arith.constant 0 : index
      %16 = vector.load %arg4[%c0, %c0_5] : memref<128x128xi8, #tpu.memory_space<vmem>>, vector<128x128xi8>
      %17 = arith.sitofp %16 : vector<128x128xi8> to vector<128x128xbf16>
      %c0_6 = arith.constant 0 : index
      %c0_7 = arith.constant 0 : index
      %18 = vector.load %arg11[%c0_6, %c0_7] : memref<128x128xf32, #tpu.memory_space<vmem>>, vector<128x128xf32>
      %c0_8 = arith.constant 0 : index
      %c0_9 = arith.constant 0 : index
      %19 = vector.load %arg5[%c0_8, %c0_9] : memref<128x128xbf16, #tpu.memory_space<vmem>>, vector<128x128xbf16>
      %cst = arith.constant dense<0.000000e+00> : vector<128x128xf32>
      %20 = tpu.matmul %17, %19, %cst {dimension_numbers = #tpu.dot_dimension_numbers<[1], [0], [0], [1], [0, 0, 1, 1], [], []>} : vector<128x128xbf16>, vector<128x128xbf16>, vector<128x128xf32> -> vector<128x128xf32>
      %21 = arith.addf %18, %20 : vector<128x128xf32>
      %c0_10 = arith.constant 0 : index
      %c0_11 = arith.constant 0 : index
      %22 = vector.load %arg11[%c0_10, %c0_11] : memref<128x128xf32, #tpu.memory_space<vmem>>, vector<128x128xf32>
      tpu.vector_store %arg11[%c0_10, %c0_11], %21 {strides = array<i32>} : memref<128x128xf32, #tpu.memory_space<vmem>>, vector<128x128xf32>,
    } else {
    }
    %c2_i32 = arith.constant 2 : i32
    %12 = arith.andi %1, %c2_i32 : i32
    %c0_i32_3 = arith.constant 0 : i32
    %13 = arith.cmpi ne, %12, %c0_i32_3 : i32
    %14 = arith.extui %13 : i1 to i32
    %c0_i32_4 = arith.constant 0 : i32
    %15 = arith.cmpi ne, %14, %c0_i32_4 : i32
    scf.if %15 {
      %c0 = arith.constant 0 : index
      %c0_5 = arith.constant 0 : index
      %16 = vector.load %arg11[%c0, %c0_5] : memref<128x128xf32, #tpu.memory_space<vmem>>, vector<128x128xf32>
      %17 = arith.truncf %16 : vector<128x128xf32> to vector<128x128xbf16>
      %c0_6 = arith.constant 0 : index
      %c0_7 = arith.constant 0 : index
      %18 = vector.load %arg6[%c0_6, %c0_7] : memref<128x128xbf16, #tpu.memory_space<vmem>>, vector<128x128xbf16>
      %c0_8 = arith.constant 0 : index
      %c0_9 = arith.constant 0 : index
      %19 = vector.load %arg7[%c0_8, %c0_9] : memref<128x128xbf16, #tpu.memory_space<vmem>>, vector<128x128xbf16>
      %cst = arith.constant dense<0.000000e+00> : vector<128x128xf32>
      %20 = tpu.matmul %18, %19, %cst {dimension_numbers = #tpu.dot_dimension_numbers<[1], [0], [0], [1], [0, 0, 1, 1], [], []>} : vector<128x128xbf16>, vector<128x128xbf16>, vector<128x128xf32> -> vector<128x128xf32>
      %c0_10 = arith.constant 0 : index
      %c0_11 = arith.constant 0 : index
      %21 = vector.load %arg8[%c0_10, %c0_11] : memref<128x128xbf16, #tpu.memory_space<vmem>>, vector<128x128xbf16>
      %cst_12 = arith.constant dense<0.000000e+00> : vector<128x128xf32>
      %22 = tpu.matmul %17, %21, %cst_12 {dimension_numbers = #tpu.dot_dimension_numbers<[1], [0], [0], [1], [0, 0, 1, 1], [], []>} : vector<128x128xbf16>, vector<128x128xbf16>, vector<128x128xf32> -> vector<128x128xf32>
      %23 = arith.addf %20, %22 : vector<128x128xf32>
      %c0_13 = arith.constant 0 : index
      %c0_14 = arith.constant 0 : index
      %24 = vector.load %arg9[%c0_13, %c0_14] : memref<1x128xf32, #tpu.memory_space<vmem>>, vector<1x128xf32>
      %25 = vector.broadcast %24 : vector<1x128xf32> to vector<128x128xf32>
      %26 = arith.addf %23, %25 : vector<128x128xf32>
      %cst_15 = arith.constant 0.000000e+00 : f32
      %27 = vector.broadcast %cst_15 : f32 to vector<128x128xf32>
      %28 = arith.maximumf %26, %27 : vector<128x128xf32>
      %29 = tpu.iota {dimensions = array<i32: 0>} : vector<128x128xi32>
      %c128_i32 = arith.constant 128 : i32
      %30 = arith.muli %3, %c128_i32 : i32
      %31 = vector.broadcast %30 : i32 to vector<128x128xi32>
      %32 = arith.addi %29, %31 : vector<128x128xi32>
      %c16_i32 = arith.constant 16 : i32
      %33 = vector.broadcast %c16_i32 : i32 to vector<128x128xi32>
      %34 = arith.cmpi slt, %32, %33 : vector<128x128xi32>
      %cst_16 = arith.constant 0.000000e+00 : f32
      %35 = vector.broadcast %cst_16 : f32 to vector<128x128xf32>
      %36 = arith.select %34, %28, %35 : vector<128x128xi1>, vector<128x128xf32>
      %37 = arith.truncf %36 : vector<128x128xf32> to vector<128x128xbf16>
      %c0_17 = arith.constant 0 : index
      %c0_18 = arith.constant 0 : index
      %38 = vector.load %arg10[%c0_17, %c0_18] : memref<128x128xbf16, #tpu.memory_space<vmem>>, vector<128x128xbf16>
      tpu.vector_store %arg10[%c0_17, %c0_18], %37 {strides = array<i32>} : memref<128x128xbf16, #tpu.memory_space<vmem>>, vector<128x128xbf16>,
    } else {
    }
    return
  }
  func.func @transform_0(%arg0: i32, %arg1: memref<8xi32, #tpu.memory_space<smem>>, %arg2: memref<8xi32, #tpu.memory_space<smem>>, %arg3: memref<8xi32, #tpu.memory_space<smem>>) -> (i32, i32) {
    %0 = arith.index_cast %arg0 : i32 to index
    %1 = memref.load %arg1[%0] : memref<8xi32, #tpu.memory_space<smem>>
    %2 = arith.index_cast %arg0 : i32 to index
    %3 = memref.load %arg2[%2] : memref<8xi32, #tpu.memory_space<smem>>
    %c0_i32 = arith.constant 0 : i32
    return %1, %3 : i32, i32
  }
  func.func @transform_1(%arg0: i32, %arg1: memref<8xi32, #tpu.memory_space<smem>>, %arg2: memref<8xi32, #tpu.memory_space<smem>>, %arg3: memref<8xi32, #tpu.memory_space<smem>>) -> (i32, i32) {
    %0 = arith.index_cast %arg0 : i32 to index
    %1 = memref.load %arg2[%0] : memref<8xi32, #tpu.memory_space<smem>>
    %c0_i32 = arith.constant 0 : i32
    %c0_i32_0 = arith.constant 0 : i32
    return %1, %c0_i32 : i32, i32
  }
  func.func @transform_2(%arg0: i32, %arg1: memref<8xi32, #tpu.memory_space<smem>>, %arg2: memref<8xi32, #tpu.memory_space<smem>>, %arg3: memref<8xi32, #tpu.memory_space<smem>>) -> (i32, i32) {
    %0 = arith.index_cast %arg0 : i32 to index
    %1 = memref.load %arg1[%0] : memref<8xi32, #tpu.memory_space<smem>>
    %c0_i32 = arith.constant 0 : i32
    %c0_i32_0 = arith.constant 0 : i32
    return %1, %c0_i32 : i32, i32
  }
  func.func @transform_3(%arg0: i32, %arg1: memref<8xi32, #tpu.memory_space<smem>>, %arg2: memref<8xi32, #tpu.memory_space<smem>>, %arg3: memref<8xi32, #tpu.memory_space<smem>>) -> (i32, i32) {
    %c0_i32 = arith.constant 0 : i32
    %c0_i32_0 = arith.constant 0 : i32
    %c0_i32_1 = arith.constant 0 : i32
    return %c0_i32, %c0_i32_0 : i32, i32
  }
  func.func @transform_4(%arg0: i32, %arg1: memref<8xi32, #tpu.memory_space<smem>>, %arg2: memref<8xi32, #tpu.memory_space<smem>>, %arg3: memref<8xi32, #tpu.memory_space<smem>>) -> (i32, i32) {
    %c0_i32 = arith.constant 0 : i32
    %c0_i32_0 = arith.constant 0 : i32
    %c0_i32_1 = arith.constant 0 : i32
    return %c0_i32, %c0_i32_0 : i32, i32
  }
  func.func @transform_5(%arg0: i32, %arg1: memref<8xi32, #tpu.memory_space<smem>>, %arg2: memref<8xi32, #tpu.memory_space<smem>>, %arg3: memref<8xi32, #tpu.memory_space<smem>>) -> (i32, i32) {
    %c0_i32 = arith.constant 0 : i32
    %c0_i32_0 = arith.constant 0 : i32
    %c0_i32_1 = arith.constant 0 : i32
    return %c0_i32, %c0_i32_0 : i32, i32
  }
  func.func @transform_6(%arg0: i32, %arg1: memref<8xi32, #tpu.memory_space<smem>>, %arg2: memref<8xi32, #tpu.memory_space<smem>>, %arg3: memref<8xi32, #tpu.memory_space<smem>>) -> (i32, i32) {
    %0 = arith.index_cast %arg0 : i32 to index
    %1 = memref.load %arg1[%0] : memref<8xi32, #tpu.memory_space<smem>>
    %c0_i32 = arith.constant 0 : i32
    %c0_i32_0 = arith.constant 0 : i32
    return %1, %c0_i32 : i32, i32
  }
}

</mosaic_0001>

<llo_original>
// kernel: tpu_custom_call.1
$region0: #{tpu_custom_call.1}
  #allocation0 [shape = 'u32[]', space=smem, size = 0x4, offset = 0x4, fixed_abs, tag = 'smem constant byte address 0x4 - core index']
  #allocation1 [shape = 'u32[72,128]{1,0:T(1,128)}', space=vmem, size = 0x9000, scoped, tag = 'internal scratch']
  #allocation2 [shape = 'f32[128,128]{1,0:T(8,128)}', space=vmem, size = 0x10000, scoped, tag = 'scratch operand']
  #allocation3 [shape = 's32[1]{0}', space=sflag, size = 0x4, scoped, tag = 'scoped memory for tpu_custom_call.1']
  #allocation4 [shape = 'u8[512]{0}', space=smem, size = 0x200, scoped, tag = 'prefetched SMEM operand 0']
  #allocation5 [shape = 'u8[512]{0}', space=smem, size = 0x200, scoped, tag = 'prefetched SMEM operand 1']
  #allocation6 [shape = 'u8[512]{0}', space=smem, size = 0x200, scoped, tag = 'prefetched SMEM operand 2']
  %s0 = inlined_call_operand.hbm [shape: s32[8], index: 0, kind: input, shape index: {}]
  %s1 = inlined_call_operand.hbm [shape: s32[8], index: 1, kind: input, shape index: {}]
  %s2 = inlined_call_operand.vmem [shape: s32[8], index: 2, kind: input, shape index: {}]
  %s3 = inlined_call_operand.hbm [shape: s8[128,128], index: 3, kind: input, shape index: {}]
  %s4 = inlined_call_operand.hbm [shape: bf16[128,128], index: 4, kind: input, shape index: {}]
  %s5 = inlined_call_operand.hbm [shape: bf16[128,128], index: 5, kind: input, shape index: {}]
  %s6 = inlined_call_operand.hbm [shape: bf16[128,128], index: 6, kind: input, shape index: {}]
  %s7 = inlined_call_operand.hbm [shape: bf16[128,128], index: 7, kind: input, shape index: {}]
  %s8 = inlined_call_operand.vmem [shape: f32[1,128], index: 8, kind: input, shape index: {}]
  %s9 = inlined_call_operand.hbm [shape: bf16[128,128], index: 9, kind: output, shape index: {}]
  %s10 = sld [smem:[#allocation0]]
  $region89: #{tpu_custom_call.1} parent=0
    _
  %s12 = ssub.s32 1, %s10
  %s13 = scalar_select 0, %s12, %s10
  %s15 = sshll.u32 %s0, 4
  %s16 = int_to_ptr.hbm [resolvable:$true] %s15
  %18 = dma.hbm_to_smem %s16, 16, [#allocation4], [#allocation3]
  %s20 = sshll.u32 %s1, 4
  %s21 = int_to_ptr.hbm [resolvable:$true] %s20
  %23 = dma.hbm_to_smem %s21, 16, [#allocation5], [#allocation3]
  %s25 = sshll.u32 %s2, 4
  %s26 = int_to_ptr.vmem [resolvable:$true] %s25
  %28 = dma.vmem_to_smem %s26, 16, [#allocation6], [#allocation3]
  %30 = dma.done [#allocation3], 48
  %31 = sfence
  $region1: #{tpu_custom_call.1} parent=0
    #allocation7 [shape = 'u8[32768]{0}', space=vmem, size = 0x8000, scoped, tag = 'input window, operand 3']
    #allocation8 [shape = 's32[2]{0}', space=sflag, size = 0x8, scoped, tag = 'scoped memory for tpu_custom_call.1']
    #allocation9 [shape = 's32[2]{0}', space=sflag, size = 0x8, scoped, tag = 'scoped memory for tpu_custom_call.1']
    #allocation10 [shape = 'u8[65536]{0}', space=vmem, size = 0x10000, scoped, tag = 'input window, operand 4']
    #allocation11 [shape = 's32[2]{0}', space=sflag, size = 0x8, scoped, tag = 'scoped memory for tpu_custom_call.1']
    #allocation12 [shape = 'u8[65536]{0}', space=vmem, size = 0x10000, scoped, tag = 'input window, operand 5']
    #allocation13 [shape = 'u8[32768]{0}', space=vmem, size = 0x8000, scoped, tag = 'input window, operand 6, single buffered']
    #allocation14 [shape = 's32[1]{0}', space=sflag, size = 0x4, scoped, tag = 'scoped memory for tpu_custom_call.1']
    #allocation15 [shape = 'u8[32768]{0}', space=vmem, size = 0x8000, scoped, tag = 'input window, operand 7, single buffered']
    #allocation16 [shape = 'u8[65536]{0}', space=vmem, size = 0x10000, scoped, tag = 'output window, operand 0']
    %32 = vsyncpa [#allocation8], 0
    %s33 = scalar_lea.sflag [#allocation8], 1
    %34 = vsyncpa %s33, 0
    %35 = vsyncpa [#allocation11], 0
    %s36 = scalar_lea.sflag [#allocation11], 1
    %37 = vsyncpa %s36, 0
    %38 = vsyncpa [#allocation14], 0
    %39 = vsyncpa [#allocation9], 0
    %s40 = scalar_lea.sflag [#allocation9], 1
    %41 = vsyncpa %s40, 0
    loop: start=0, step=1, limit=10
    $region2: #{tpu_custom_call.1} parent=1 // loop_pre_header
      _
    $region3: #{tpu_custom_call.1} parent=1 // loop_header
      %s43 = sphi 0, %s47
      %p44 = scmp.ge.s32.totalorder %s43, 10
      %s59 = sphi 0, %s61
      %s62 = sphi 0, %s59
      %s63 = sphi 0, %s62
      %s79 = sphi 0, %s63
      %s87 = sphi 0, %s89
      %s90 = sphi 0, %s87
      %s91 = sphi 0, %s90
      %s107 = sphi 0, %s91
      %s115 = sphi 0, %s117
      %s118 = sphi 0, %s115
      %s119 = sphi 0, %s118
      %s135 = sphi 0, %s119
      %s139 = sphi 0, %s139
      %s141 = sphi 0, %s139
      %s142 = sphi 0, %s141
      %s156 = sphi 0, %s142
      %s160 = sphi 0, %s160
      %s162 = sphi 0, %s160
      %s163 = sphi 0, %s162
      %s177 = sphi 0, %s163
      %s181 = sphi 0, %s181
      %s183 = sphi 0, %s181
      %s184 = sphi 0, %s183
      %s198 = sphi 0, %s184
      %s206 = sphi 0, %s208
      %s209 = sphi 0, %s206
      %s210 = sphi 0, %s209
      %s226 = sphi 0, %s210
    $region4: #{tpu_custom_call.1} parent=1 // loop_header_branch
      %46 = sbr.rel (%p44) target = $region8
    $region5: #{tpu_custom_call.1} parent=1 // loop_body
      %s48 = ssub.s32 %s43, 1
      %s49 = ssub.s32 %s43, 2
      %s50 = sadd.s32 %s43, 1
      %s51 = sld [smem:[#allocation4 + %s43]]
      %s52 = sld [smem:[#allocation5 + %s43]]
      %s53 = sld [smem:[#allocation4 + %s50]]
      %s54 = sld [smem:[#allocation5 + %s50]]
      %s55 = ssub.s32 %s51, %s53
      %s56 = ssub.s32 %s52, %s54
      %s57 = sor.u32 %s55, %s56
      %p58 = scmp.eq.s32.totalorder %s57, 0
      %s60 = sadd.s32 %s59, 1
      %s61 = scalar_select %p58, %s59, %s60
      %p64 = pneg %p58
      %p65 = scmp.eq.s32.totalorder %s43, 7
      %p66 = por %p64, %p65
      %p67 = scmp.ne.s32.totalorder %s59, %s62
      %p68 = scmp.eq.s32.totalorder %s43, 0
      %p69 = por %p67, %p68
      %p70 = scmp.ne.s32.totalorder %s59, %s62
      %p71 = scmp.eq.s32.totalorder %s48, 7
      %p72 = por %p70, %p71
      %p73 = scmp.ne.s32.totalorder %s62, %s63
      %p74 = scmp.eq.s32.totalorder %s48, 0
      %p75 = por %p73, %p74
      %p76 = scmp.ne.s32.totalorder %s62, %s63
      %p77 = scmp.eq.s32.totalorder %s49, 7
      %p78 = por %p76, %p77
      %p80 = scmp.ne.s32.totalorder %s63, %s79
      %p81 = scmp.eq.s32.totalorder %s49, 0
      %p82 = por %p80, %p81
      %s83 = sld [smem:[#allocation5 + %s43]]
      %s84 = sld [smem:[#allocation5 + %s50]]
      %s85 = ssub.s32 %s83, %s84
      %p86 = scmp.eq.s32.totalorder %s85, 0
      %s88 = sadd.s32 %s87, 1
      %s89 = scalar_select %p86, %s87, %s88
      %p92 = pneg %p86
      %p93 = scmp.eq.s32.totalorder %s43, 7
      %p94 = por %p92, %p93
      %p95 = scmp.ne.s32.totalorder %s87, %s90
      %p96 = scmp.eq.s32.totalorder %s43, 0
      %p97 = por %p95, %p96
      %p98 = scmp.ne.s32.totalorder %s87, %s90
      %p99 = scmp.eq.s32.totalorder %s48, 7
      %p100 = por %p98, %p99
      %p101 = scmp.ne.s32.totalorder %s90, %s91
      %p102 = scmp.eq.s32.totalorder %s48, 0
      %p103 = por %p101, %p102
      %p104 = scmp.ne.s32.totalorder %s90, %s91
      %p105 = scmp.eq.s32.totalorder %s49, 7
      %p106 = por %p104, %p105
      %p108 = scmp.ne.s32.totalorder %s91, %s107
      %p109 = scmp.eq.s32.totalorder %s49, 0
      %p110 = por %p108, %p109
      %s111 = sld [smem:[#allocation4 + %s43]]
      %s112 = sld [smem:[#allocation4 + %s50]]
      %s113 = ssub.s32 %s111, %s112
      %p114 = scmp.eq.s32.totalorder %s113, 0
      %s116 = sadd.s32 %s115, 1
      %s117 = scalar_select %p114, %s115, %s116
      %p120 = pneg %p114
      %p121 = scmp.eq.s32.totalorder %s43, 7
      %p122 = por %p120, %p121
      %p123 = scmp.ne.s32.totalorder %s115, %s118
      %p124 = scmp.eq.s32.totalorder %s43, 0
      %p125 = por %p123, %p124
      %p126 = scmp.ne.s32.totalorder %s115, %s118
      %p127 = scmp.eq.s32.totalorder %s48, 7
      %p128 = por %p126, %p127
      %p129 = scmp.ne.s32.totalorder %s118, %s119
      %p130 = scmp.eq.s32.totalorder %s48, 0
      %p131 = por %p129, %p130
      %p132 = scmp.ne.s32.totalorder %s118, %s119
      %p133 = scmp.eq.s32.totalorder %s49, 7
      %p134 = por %p132, %p133
      %p136 = scmp.ne.s32.totalorder %s119, %s135
      %p137 = scmp.eq.s32.totalorder %s49, 0
      %p138 = por %p136, %p137
      %s140 = sadd.s32 %s139, 1
      %p143 = scmp.eq.s32.totalorder %s43, 7
      %p144 = scmp.ne.s32.totalorder %s139, %s141
      %p145 = scmp.eq.s32.totalorder %s43, 0
      %p146 = por %p144, %p145
      %p147 = scmp.ne.s32.totalorder %s139, %s141
      %p148 = scmp.eq.s32.totalorder %s48, 7
      %p149 = por %p147, %p148
      %p150 = scmp.ne.s32.totalorder %s141, %s142
      %p151 = scmp.eq.s32.totalorder %s48, 0
      %p152 = por %p150, %p151
      %p153 = scmp.ne.s32.totalorder %s141, %s142
      %p154 = scmp.eq.s32.totalorder %s49, 7
      %p155 = por %p153, %p154
      %p157 = scmp.ne.s32.totalorder %s142, %s156
      %p158 = scmp.eq.s32.totalorder %s49, 0
      %p159 = por %p157, %p158
      %s161 = sadd.s32 %s160, 1
      %p164 = scmp.eq.s32.totalorder %s43, 7
      %p165 = scmp.ne.s32.totalorder %s160, %s162
      %p166 = scmp.eq.s32.totalorder %s43, 0
      %p167 = por %p165, %p166
      %p168 = scmp.ne.s32.totalorder %s160, %s162
      %p169 = scmp.eq.s32.totalorder %s48, 7
      %p170 = por %p168, %p169
      %p171 = scmp.ne.s32.totalorder %s162, %s163
      %p172 = scmp.eq.s32.totalorder %s48, 0
      %p173 = por %p171, %p172
      %p174 = scmp.ne.s32.totalorder %s162, %s163
      %p175 = scmp.eq.s32.totalorder %s49, 7
      %p176 = por %p174, %p175
      %p178 = scmp.ne.s32.totalorder %s163, %s177
      %p179 = scmp.eq.s32.totalorder %s49, 0
      %p180 = por %p178, %p179
      %s182 = sadd.s32 %s181, 1
      %p185 = scmp.eq.s32.totalorder %s43, 7
      %p186 = scmp.ne.s32.totalorder %s181, %s183
      %p187 = scmp.eq.s32.totalorder %s43, 0
      %p188 = por %p186, %p187
      %p189 = scmp.ne.s32.totalorder %s181, %s183
      %p190 = scmp.eq.s32.totalorder %s48, 7
      %p191 = por %p189, %p190
      %p192 = scmp.ne.s32.totalorder %s183, %s184
      %p193 = scmp.eq.s32.totalorder %s48, 0
      %p194 = por %p192, %p193
      %p195 = scmp.ne.s32.totalorder %s183, %s184
      %p196 = scmp.eq.s32.totalorder %s49, 7
      %p197 = por %p195, %p196
      %p199 = scmp.ne.s32.totalorder %s184, %s198
      %p200 = scmp.eq.s32.totalorder %s49, 0
      %p201 = por %p199, %p200
      %s202 = sld [smem:[#allocation4 + %s43]]
      %s203 = sld [smem:[#allocation4 + %s50]]
      %s204 = ssub.s32 %s202, %s203
      %p205 = scmp.eq.s32.totalorder %s204, 0
      %s207 = sadd.s32 %s206, 1
      %s208 = scalar_select %p205, %s206, %s207
      %p211 = pneg %p205
      %p212 = scmp.eq.s32.totalorder %s43, 7
      %p213 = por %p211, %p212
      %p214 = scmp.ne.s32.totalorder %s206, %s209
      %p215 = scmp.eq.s32.totalorder %s43, 0
      %p216 = por %p214, %p215
      %p217 = scmp.ne.s32.totalorder %s206, %s209
      %p218 = scmp.eq.s32.totalorder %s48, 7
      %p219 = por %p217, %p218
      %p220 = scmp.ne.s32.totalorder %s209, %s210
      %p221 = scmp.eq.s32.totalorder %s48, 0
      %p222 = por %p220, %p221
      %p223 = scmp.ne.s32.totalorder %s209, %s210
      %p224 = scmp.eq.s32.totalorder %s49, 7
      %p225 = por %p223, %p224
      %p227 = scmp.ne.s32.totalorder %s210, %s226
      %p228 = scmp.eq.s32.totalorder %s49, 0
      %p229 = por %p227, %p228
      %p230 = scmp.le.s32.totalorder 1, %s43
      %p231 = scmp.lt.s32.totalorder %s43, 9
      %p232 = pnand %p230, %p231
      %p233 = pneg %p232
      // Predicated region
      $region9: #{tpu_custom_call.1} parent=5 // pred_check
        _
      $region10: #{tpu_custom_call.1} parent=5 // pred_check_branch
        %235 = sbr.rel (%p232) target = $region12
      $region11: #{tpu_custom_call.1} parent=5 // pred_region
        %s236 = ssub.s32 %s43, 1
        // Predicated region
        $region13: #{tpu_custom_call.1} parent=11 // pred_check
          %p237 = pneg %p152
        $region14: #{tpu_custom_call.1} parent=11 // pred_check_branch
          %239 = sbr.rel (%p237) target = $region16
        $region15: #{tpu_custom_call.1} parent=11 // pred_region
          %241 = vsyncadd [#allocation14], 0
          %s242 = sshll.u32 %s6, 4
          %s243 = int_to_ptr.hbm [resolvable:$true] %s242
          %s244 = sshll.u32 [#allocation13], 4
          %s245 = int_to_ptr.vmem [resolvable:$true] %s244
          %250 = dma.hbm_to_vmem [thread:$0]  %s243, 1024, %s245, [#allocation14], 64, 64, 4
        $region16: #{tpu_custom_call.1} parent=11 // pred_fallthru
          _
        // Predicated region
        $region17: #{tpu_custom_call.1} parent=11 // pred_check
          %p251 = pneg %p173
        $region18: #{tpu_custom_call.1} parent=11 // pred_check_branch
          %253 = sbr.rel (%p251) target = $region20
        $region19: #{tpu_custom_call.1} parent=11 // pred_region
          %255 = vsyncadd [#allocation14], 0
          %s256 = sshll.u32 %s7, 4
          %s257 = int_to_ptr.hbm [resolvable:$true] %s256
          %s258 = sshll.u32 [#allocation15], 4
          %s259 = int_to_ptr.vmem [resolvable:$true] %s258
          %264 = dma.hbm_to_vmem [thread:$0]  %s257, 1024, %s259, [#allocation14], 64, 64, 4
        $region20: #{tpu_custom_call.1} parent=11 // pred_fallthru
          _
        // Predicated region
        $region21: #{tpu_custom_call.1} parent=11 // pred_check
          %p265 = pneg %p194
        $region22: #{tpu_custom_call.1} parent=11 // pred_check_branch
          %267 = sbr.rel (%p265) target = $region24
        $region23: #{tpu_custom_call.1} parent=11 // pred_region
          _
        $region24: #{tpu_custom_call.1} parent=11 // pred_fallthru
          _
      $region12: #{tpu_custom_call.1} parent=5 // pred_fallthru
        _
      %p268 = scmp.lt.s32.totalorder %s43, 8
      // Predicated region
      $region25: #{tpu_custom_call.1} parent=5 // pred_check
        %p269 = pneg %p268
      $region26: #{tpu_custom_call.1} parent=5 // pred_check_branch
        %271 = sbr.rel (%p269) target = $region28
      $region27: #{tpu_custom_call.1} parent=5 // pred_region
        // Predicated region
        $region29: #{tpu_custom_call.1} parent=27 // pred_check
          %p272 = pneg %p69
        $region30: #{tpu_custom_call.1} parent=27 // pred_check_branch
          %274 = sbr.rel (%p272) target = $region32
        $region31: #{tpu_custom_call.1} parent=27 // pred_region
          %s275 = sand.u32 %s59, 1
          %s276 = scalar_lea.sflag [#allocation8], %s275
          %s277 = sand.u32 %s59, 1
          %s278 = smul.addr %s277, 32
          %s279 = scalar_lea.vmem [#allocation7], %s278
          %s280 = sld [smem:[#allocation4 + %s43]]
          %s281 = sld [smem:[#allocation5 + %s43]]
          %s282 = smul.u32 4, %s280
          %284 = vsyncadd %s276, 0
          %s285 = sadd.s32 %s281, %s282
          %s286 = smul.addr %s285, 8
          %s287 = scalar_lea.hbm %s3, %s286
          %s288 = sshll.u32 %s287, 4
          %s289 = int_to_ptr.hbm [resolvable:$true] %s288
          %s290 = sshll.u32 %s279, 4
          %s291 = int_to_ptr.vmem [resolvable:$true] %s290
          %296 = dma.hbm_to_vmem [thread:$0]  %s289, 512, %s291, %s276, 128, 128, 8
        $region32: #{tpu_custom_call.1} parent=27 // pred_fallthru
          _
        // Predicated region
        $region33: #{tpu_custom_call.1} parent=27 // pred_check
          %p297 = pneg %p97
        $region34: #{tpu_custom_call.1} parent=27 // pred_check_branch
          %299 = sbr.rel (%p297) target = $region36
        $region35: #{tpu_custom_call.1} parent=27 // pred_region
          %s300 = sand.u32 %s43, 1
          %s301 = scalar_lea.sflag [#allocation11], %s300
          %s302 = sand.u32 %s87, 1
          %s303 = smul.addr %s302, 64
          %s304 = scalar_lea.vmem [#allocation10], %s303
          %s305 = sld [smem:[#allocation5 + %s43]]
          %s306 = smul.u32 16, %s305
          %308 = vsyncadd %s301, 0
          %s309 = smul.addr %s306, 4
          %s310 = scalar_lea.hbm %s4, %s309
          %s311 = sshll.u32 %s310, 4
          %s312 = int_to_ptr.hbm [resolvable:$true] %s311
          %s313 = sshll.u32 %s304, 4
          %s314 = int_to_ptr.vmem [resolvable:$true] %s313
          %319 = dma.hbm_to_vmem [thread:$0]  %s312, 1024, %s314, %s301, 64, 64, 4
        $region36: #{tpu_custom_call.1} parent=27 // pred_fallthru
          _
        // Predicated region
        $region37: #{tpu_custom_call.1} parent=27 // pred_check
          %p320 = pneg %p125
        $region38: #{tpu_custom_call.1} parent=27 // pred_check_branch
          %322 = sbr.rel (%p320) target = $region40
        $region39: #{tpu_custom_call.1} parent=27 // pred_region
          %s323 = sand.u32 %s43, 1
          %s324 = scalar_lea.sflag [#allocation11], %s323
          %s325 = sand.u32 %s115, 1
          %s326 = smul.addr %s325, 64
          %s327 = scalar_lea.vmem [#allocation12], %s326
          %s328 = sld [smem:[#allocation4 + %s43]]
          %s329 = smul.u32 16, %s328
          %331 = vsyncadd %s324, 0
          %s332 = smul.addr %s329, 4
          %s333 = scalar_lea.hbm %s5, %s332
          %s334 = sshll.u32 %s333, 4
          %s335 = int_to_ptr.hbm [resolvable:$true] %s334
          %s336 = sshll.u32 %s327, 4
          %s337 = int_to_ptr.vmem [resolvable:$true] %s336
          %342 = dma.hbm_to_vmem [thread:$0]  %s335, 1024, %s337, %s324, 64, 64, 4
        $region40: #{tpu_custom_call.1} parent=27 // pred_fallthru
          _
      $region28: #{tpu_custom_call.1} parent=5 // pred_fallthru
        _
      %p343 = scmp.le.s32.totalorder 1, %s43
      %p344 = scmp.lt.s32.totalorder %s43, 9
      %p345 = pnand %p343, %p344
      %p346 = pneg %p345
      // Predicated region
      $region41: #{tpu_custom_call.1} parent=5 // pred_check
        _
      $region42: #{tpu_custom_call.1} parent=5 // pred_check_branch
        %348 = sbr.rel (%p345) target = $region44
      $region43: #{tpu_custom_call.1} parent=5 // pred_region
        %s349 = ssub.s32 %s43, 1
        %s350 = sand.u32 %s62, 1
        %s351 = scalar_lea.sflag [#allocation8], %s350
        %s352 = sand.u32 %s62, 1
        %s353 = smul.addr %s352, 32
        %s354 = scalar_lea.vmem [#allocation7], %s353
        // Predicated region
        $region45: #{tpu_custom_call.1} parent=43 // pred_check
          %p355 = pneg %p75
        $region46: #{tpu_custom_call.1} parent=43 // pred_check_branch
          %357 = sbr.rel (%p355) target = $region48
        $region47: #{tpu_custom_call.1} parent=43 // pred_region
          %359 = dma.done %s351, 512
        $region48: #{tpu_custom_call.1} parent=43 // pred_fallthru
          _
        %s360 = sand.u32 %s48, 1
        %s361 = scalar_lea.sflag [#allocation11], %s360
        %s362 = sand.u32 %s90, 1
        %s363 = smul.addr %s362, 64
        %s364 = scalar_lea.vmem [#allocation10], %s363
        // Predicated region
        $region49: #{tpu_custom_call.1} parent=43 // pred_check
          %p365 = pneg %p103
        $region50: #{tpu_custom_call.1} parent=43 // pred_check_branch
          %367 = sbr.rel (%p365) target = $region52
        $region51: #{tpu_custom_call.1} parent=43 // pred_region
          %369 = dma.done %s361, 1024
        $region52: #{tpu_custom_call.1} parent=43 // pred_fallthru
          _
        %s370 = sand.u32 %s48, 1
        %s371 = scalar_lea.sflag [#allocation11], %s370
        %s372 = sand.u32 %s118, 1
        %s373 = smul.addr %s372, 64
        %s374 = scalar_lea.vmem [#allocation12], %s373
        // Predicated region
        $region53: #{tpu_custom_call.1} parent=43 // pred_check
          %p375 = pneg %p131
        $region54: #{tpu_custom_call.1} parent=43 // pred_check_branch
          %377 = sbr.rel (%p375) target = $region56
        $region55: #{tpu_custom_call.1} parent=43 // pred_region
          %379 = dma.done %s371, 1024
        $region56: #{tpu_custom_call.1} parent=43 // pred_fallthru
          _
        // Predicated region
        $region57: #{tpu_custom_call.1} parent=43 // pred_check
          %p380 = pneg %p152
        $region58: #{tpu_custom_call.1} parent=43 // pred_check_branch
          %382 = sbr.rel (%p380) target = $region60
        $region59: #{tpu_custom_call.1} parent=43 // pred_region
          %384 = dma.done [#allocation14], 1024
        $region60: #{tpu_custom_call.1} parent=43 // pred_fallthru
          _
        // Predicated region
        $region61: #{tpu_custom_call.1} parent=43 // pred_check
          %p385 = pneg %p173
        $region62: #{tpu_custom_call.1} parent=43 // pred_check_branch
          %387 = sbr.rel (%p385) target = $region64
        $region63: #{tpu_custom_call.1} parent=43 // pred_region
          %389 = dma.done [#allocation14], 1024
        $region64: #{tpu_custom_call.1} parent=43 // pred_fallthru
          _
        %s390 = sand.u32 %s62, 1
        %s391 = scalar_lea.sflag [#allocation8], %s390
        %s392 = sand.u32 %s62, 1
        %s393 = smul.addr %s392, 32
        %s394 = scalar_lea.vmem [#allocation7], %s393
        %p395 = pneg %p75
        %p396 = pneg %p72
        %s397 = sand.u32 %s48, 1
        %s398 = scalar_lea.sflag [#allocation11], %s397
        %s399 = sand.u32 %s90, 1
        %s400 = smul.addr %s399, 64
        %s401 = scalar_lea.vmem [#allocation10], %s400
        %p402 = pneg %p103
        %p403 = pneg %p100
        %s404 = sand.u32 %s48, 1
        %s405 = scalar_lea.sflag [#allocation11], %s404
        %s406 = sand.u32 %s118, 1
        %s407 = smul.addr %s406, 64
        %s408 = scalar_lea.vmem [#allocation12], %s407
        %p409 = pneg %p131
        %p410 = pneg %p128
        %p411 = pneg %p152
        %p412 = pneg %p149
        %p413 = pneg %p173
        %p414 = pneg %p170
        %p415 = pneg %p194
        %p416 = pneg %p191
        %p417 = pneg %p222
        %p418 = pneg %p219
        %s419 = sand.u32 %s209, 1
        %s420 = scalar_lea.sflag [#allocation9], %s419
        %s421 = sand.u32 %s209, 1
        %s422 = smul.addr %s421, 64
        %s423 = scalar_lea.vmem [#allocation16], %s422
        %s424 = sld [smem:[#allocation4 + %s48]]
        %s425 = sld [smem:[#allocation5 + %s48]]
        %s426 = smul.u32 4, %s424
        %s427 = sld [smem:[#allocation5 + %s48]]
        %s428 = smul.u32 16, %s427
        %s429 = sld [smem:[#allocation4 + %s48]]
        %s430 = smul.u32 16, %s429
        %s431 = sld [smem:[#allocation4 + %s48]]
        %s432 = smul.u32 16, %s431
        %s433 = sld [smem:[#allocation6 + %s48]]
        %s434 = sld [smem:[#allocation4 + %s48]]
        %s435 = sand.u32 %s433, 1
        %p436 = scmp.ne.s32.totalorder %s435, 0
        // Predicated region
        $region65: #{tpu_custom_call.1} parent=43 // pred_check
          %p437 = pneg %p436
        $region66: #{tpu_custom_call.1} parent=43 // pred_check_branch
          %439 = sbr.rel (%p437) target = $region68
        $region67: #{tpu_custom_call.1} parent=43 // pred_region
          %440 = vst [vmem:[#allocation2] sm:$0xff] 0.0
          %441 = vst [vmem:[#allocation2 + $0x8] sm:$0xff] 0.0
          %442 = vst [vmem:[#allocation2 + $0x10] sm:$0xff] 0.0
          %443 = vst [vmem:[#allocation2 + $0x18] sm:$0xff] 0.0
          %444 = vst [vmem:[#allocation2 + $0x20] sm:$0xff] 0.0
          %445 = vst [vmem:[#allocation2 + $0x28] sm:$0xff] 0.0
          %446 = vst [vmem:[#allocation2 + $0x30] sm:$0xff] 0.0
          %447 = vst [vmem:[#allocation2 + $0x38] sm:$0xff] 0.0
          %448 = vst [vmem:[#allocation2 + $0x40] sm:$0xff] 0.0
          %449 = vst [vmem:[#allocation2 + $0x48] sm:$0xff] 0.0
          %450 = vst [vmem:[#allocation2 + $0x50] sm:$0xff] 0.0
          %451 = vst [vmem:[#allocation2 + $0x58] sm:$0xff] 0.0
          %452 = vst [vmem:[#allocation2 + $0x60] sm:$0xff] 0.0
          %453 = vst [vmem:[#allocation2 + $0x68] sm:$0xff] 0.0
          %454 = vst [vmem:[#allocation2 + $0x70] sm:$0xff] 0.0
          %455 = vst [vmem:[#allocation2 + $0x78] sm:$0xff] 0.0
        $region68: #{tpu_custom_call.1} parent=43 // pred_fallthru
          _
        %s456 = sand.u32 %s433, 4
        %p457 = scmp.ne.s32.totalorder %s456, 0
        // Predicated region
        $region69: #{tpu_custom_call.1} parent=43 // pred_check
          %p458 = pneg %p457
        $region70: #{tpu_custom_call.1} parent=43 // pred_check_branch
          %460 = sbr.rel (%p458) target = $region72
        $region71: #{tpu_custom_call.1} parent=43 // pred_region
          %v461 = vld [vmem:[%s354] sm:$0xff]
          %v462 = vld [vmem:[%s354 + $0x8] sm:$0xff]
          %v463 = vld [vmem:[%s354 + $0x10] sm:$0xff]
          %v464 = vld [vmem:[%s354 + $0x18] sm:$0xff]
          %v465 = vunpack.c.0.s8 %v461
          %v466 = vunpack.c.1.s8 %v461
          %v467 = vunpack.c.2.s8 %v461
          %v468 = vunpack.c.3.s8 %v461
          %v469 = vunpack.c.0.s8 %v462
          %v470 = vunpack.c.1.s8 %v462
          %v471 = vunpack.c.2.s8 %v462
          %v472 = vunpack.c.3.s8 %v462
          %v473 = vunpack.c.0.s8 %v463
          %v474 = vunpack.c.1.s8 %v463
          %v475 = vunpack.c.2.s8 %v463
          %v476 = vunpack.c.3.s8 %v463
          %v477 = vunpack.c.0.s8 %v464
          %v478 = vunpack.c.1.s8 %v464
          %v479 = vunpack.c.2.s8 %v464
          %v480 = vunpack.c.3.s8 %v464
          %v481 = vcvt.s32.f32 %v465
          %v482 = vcvt.s32.f32 %v466
          %v483 = vcvt.s32.f32 %v467
          %v484 = vcvt.s32.f32 %v468
          %v485 = vcvt.s32.f32 %v469
          %v486 = vcvt.s32.f32 %v470
          %v487 = vcvt.s32.f32 %v471
          %v488 = vcvt.s32.f32 %v472
          %v489 = vcvt.s32.f32 %v473
          %v490 = vcvt.s32.f32 %v474
          %v491 = vcvt.s32.f32 %v475
          %v492 = vcvt.s32.f32 %v476
          %v493 = vcvt.s32.f32 %v477
          %v494 = vcvt.s32.f32 %v478
          %v495 = vcvt.s32.f32 %v479
          %v496 = vcvt.s32.f32 %v480
          %v497 = vpack.c.bf16 %v482, %v481
          %v498 = vpack.c.bf16 %v484, %v483
          %v499 = vpack.c.bf16 %v486, %v485
          %v500 = vpack.c.bf16 %v488, %v487
          %v501 = vpack.c.bf16 %v490, %v489
          %v502 = vpack.c.bf16 %v492, %v491
          %v503 = vpack.c.bf16 %v494, %v493
          %v504 = vpack.c.bf16 %v496, %v495
          %v505 = vld [vmem:[#allocation2] sm:$0xff]
          %v506 = vld [vmem:[#allocation2 + $0x8] sm:$0xff]
          %v507 = vld [vmem:[#allocation2 + $0x10] sm:$0xff]
          %v508 = vld [vmem:[#allocation2 + $0x18] sm:$0xff]
          %v509 = vld [vmem:[#allocation2 + $0x20] sm:$0xff]
          %v510 = vld [vmem:[#allocation2 + $0x28] sm:$0xff]
          %v511 = vld [vmem:[#allocation2 + $0x30] sm:$0xff]
          %v512 = vld [vmem:[#allocation2 + $0x38] sm:$0xff]
          %v513 = vld [vmem:[#allocation2 + $0x40] sm:$0xff]
          %v514 = vld [vmem:[#allocation2 + $0x48] sm:$0xff]
          %v515 = vld [vmem:[#allocation2 + $0x50] sm:$0xff]
          %v516 = vld [vmem:[#allocation2 + $0x58] sm:$0xff]
          %v517 = vld [vmem:[#allocation2 + $0x60] sm:$0xff]
          %v518 = vld [vmem:[#allocation2 + $0x68] sm:$0xff]
          %v519 = vld [vmem:[#allocation2 + $0x70] sm:$0xff]
          %v520 = vld [vmem:[#allocation2 + $0x78] sm:$0xff]
          %v521 = vld [vmem:[%s364] sm:$0xf]
          %v522 = vld [vmem:[%s364 + $0x4] sm:$0xf]
          %v523 = vld [vmem:[%s364 + $0x8] sm:$0xf]
          %v524 = vld [vmem:[%s364 + $0xc] sm:$0xf]
          %v525 = vld [vmem:[%s364 + $0x10] sm:$0xf]
          %v526 = vld [vmem:[%s364 + $0x14] sm:$0xf]
          %v527 = vld [vmem:[%s364 + $0x18] sm:$0xf]
          %v528 = vld [vmem:[%s364 + $0x1c] sm:$0xf]
          %v529 = vld [vmem:[%s364 + $0x20] sm:$0xf]
          %v530 = vld [vmem:[%s364 + $0x24] sm:$0xf]
          %v531 = vld [vmem:[%s364 + $0x28] sm:$0xf]
          %v532 = vld [vmem:[%s364 + $0x2c] sm:$0xf]
          %v533 = vld [vmem:[%s364 + $0x30] sm:$0xf]
          %v534 = vld [vmem:[%s364 + $0x34] sm:$0xf]
          %v535 = vld [vmem:[%s364 + $0x38] sm:$0xf]
          %v536 = vld [vmem:[%s364 + $0x3c] sm:$0xf]
          %v553 = vunpack.c.l.b16 %v521
          %v554 = vunpack.c.l.b16 %v522
          %v555 = vunpack.c.l.b16 %v523
          %v556 = vunpack.c.l.b16 %v524
          %v557 = vunpack.c.l.b16 %v525
          %v558 = vunpack.c.l.b16 %v526
          %v559 = vunpack.c.l.b16 %v527
          %v560 = vunpack.c.l.b16 %v528
          %v561 = vunpack.c.l.b16 %v529
          %v562 = vunpack.c.l.b16 %v530
          %v563 = vunpack.c.l.b16 %v531
          %v564 = vunpack.c.l.b16 %v532
          %v565 = vunpack.c.l.b16 %v533
          %v566 = vunpack.c.l.b16 %v534
          %v567 = vunpack.c.l.b16 %v535
          %v568 = vunpack.c.l.b16 %v536
          %v569 = vpack.c.b16 %v554, %v553
          %v570 = vpack.c.b16 %v556, %v555
          %v571 = vpack.c.b16 %v558, %v557
          %v572 = vpack.c.b16 %v560, %v559
          %v573 = vpack.c.b16 %v562, %v561
          %v574 = vpack.c.b16 %v564, %v563
          %v575 = vpack.c.b16 %v566, %v565
          %v576 = vpack.c.b16 %v568, %v567
          %585 = vmatpush.bf16.msra.mxu0 %v576
          %586 = vmatpush.bf16.msra.mxu0 %v575
          %587 = vmatpush.bf16.msra.mxu0 %v574
          %588 = vmatpush.bf16.msra.mxu0 %v573
          %589 = vmatpush.bf16.msra.mxu0 %v572
          %590 = vmatpush.bf16.msra.mxu0 %v571
          %591 = vmatpush.bf16.msra.mxu0 %v570
          %592 = vmatpush.bf16.msra.mxu0 %v569
          %593 = vmatmul.bf16.gmra.mxu0 %v497
          %v594 = vpop.f32.mrf.mxu0
          %v595 = vadd.f32 0.0, %v594
          %v596 = vpop.f32.mrf.mxu0
          %v597 = vadd.f32 0.0, %v596
          %598 = vmatmul.bf16.gmra.mxu0 %v498
          %v599 = vpop.f32.mrf.mxu0
          %v600 = vadd.f32 0.0, %v599
          %v601 = vpop.f32.mrf.mxu0
          %v602 = vadd.f32 0.0, %v601
          %603 = vmatmul.bf16.gmra.mxu0 %v499
          %v604 = vpop.f32.mrf.mxu0
          %v605 = vadd.f32 0.0, %v604
          %v606 = vpop.f32.mrf.mxu0
          %v607 = vadd.f32 0.0, %v606
          %608 = vmatmul.bf16.gmra.mxu0 %v500
          %v609 = vpop.f32.mrf.mxu0
          %v610 = vadd.f32 0.0, %v609
          %v611 = vpop.f32.mrf.mxu0
          %v612 = vadd.f32 0.0, %v611
          %613 = vmatmul.bf16.gmra.mxu0 %v501
          %v614 = vpop.f32.mrf.mxu0
          %v615 = vadd.f32 0.0, %v614
          %v616 = vpop.f32.mrf.mxu0
          %v617 = vadd.f32 0.0, %v616
          %618 = vmatmul.bf16.gmra.mxu0 %v502
          %v619 = vpop.f32.mrf.mxu0
          %v620 = vadd.f32 0.0, %v619
          %v621 = vpop.f32.mrf.mxu0
          %v622 = vadd.f32 0.0, %v621
          %623 = vmatmul.bf16.gmra.mxu0 %v503
          %v624 = vpop.f32.mrf.mxu0
          %v625 = vadd.f32 0.0, %v624
          %v626 = vpop.f32.mrf.mxu0
          %v627 = vadd.f32 0.0, %v626
          %628 = vmatmul.bf16.gmra.mxu0 %v504
          %v629 = vpop.f32.mrf.mxu0
          %v630 = vadd.f32 0.0, %v629
          %v631 = vpop.f32.mrf.mxu0
          %v632 = vadd.f32 0.0, %v631
          %633 = vdwg.mxu0
          %v634 = vadd.f32 %v505, %v595
          %v635 = vadd.f32 %v506, %v597
          %v636 = vadd.f32 %v507, %v600
          %v637 = vadd.f32 %v508, %v602
          %v638 = vadd.f32 %v509, %v605
          %v639 = vadd.f32 %v510, %v607
          %v640 = vadd.f32 %v511, %v610
          %v641 = vadd.f32 %v512, %v612
          %v642 = vadd.f32 %v513, %v615
          %v643 = vadd.f32 %v514, %v617
          %v644 = vadd.f32 %v515, %v620
          %v645 = vadd.f32 %v516, %v622
          %v646 = vadd.f32 %v517, %v625
          %v647 = vadd.f32 %v518, %v627
          %v648 = vadd.f32 %v519, %v630
          %v649 = vadd.f32 %v520, %v632
          %650 = vst [vmem:[#allocation2] sm:$0xff] %v634
          %651 = vst [vmem:[#allocation2 + $0x8] sm:$0xff] %v635
          %652 = vst [vmem:[#allocation2 + $0x10] sm:$0xff] %v636
          %653 = vst [vmem:[#allocation2 + $0x18] sm:$0xff] %v637
          %654 = vst [vmem:[#allocation2 + $0x20] sm:$0xff] %v638
          %655 = vst [vmem:[#allocation2 + $0x28] sm:$0xff] %v639
          %656 = vst [vmem:[#allocation2 + $0x30] sm:$0xff] %v640
          %657 = vst [vmem:[#allocation2 + $0x38] sm:$0xff] %v641
          %658 = vst [vmem:[#allocation2 + $0x40] sm:$0xff] %v642
          %659 = vst [vmem:[#allocation2 + $0x48] sm:$0xff] %v643
          %660 = vst [vmem:[#allocation2 + $0x50] sm:$0xff] %v644
          %661 = vst [vmem:[#allocation2 + $0x58] sm:$0xff] %v645
          %662 = vst [vmem:[#allocation2 + $0x60] sm:$0xff] %v646
          %663 = vst [vmem:[#allocation2 + $0x68] sm:$0xff] %v647
          %664 = vst [vmem:[#allocation2 + $0x70] sm:$0xff] %v648
          %665 = vst [vmem:[#allocation2 + $0x78] sm:$0xff] %v649
        $region72: #{tpu_custom_call.1} parent=43 // pred_fallthru
          _
        %s666 = sand.u32 %s433, 2
        %p667 = scmp.ne.s32.totalorder %s666, 0
        // Predicated region
        $region73: #{tpu_custom_call.1} parent=43 // pred_check
          %p668 = pneg %p667
        $region74: #{tpu_custom_call.1} parent=43 // pred_check_branch
          %670 = sbr.rel (%p668) target = $region76
        $region75: #{tpu_custom_call.1} parent=43 // pred_region
          %v671 = vld [vmem:[#allocation2] sm:$0xff]
          %v672 = vld [vmem:[#allocation2 + $0x8] sm:$0xff]
          %v673 = vld [vmem:[#allocation2 + $0x10] sm:$0xff]
          %v674 = vld [vmem:[#allocation2 + $0x18] sm:$0xff]
          %v675 = vld [vmem:[#allocation2 + $0x20] sm:$0xff]
          %v676 = vld [vmem:[#allocation2 + $0x28] sm:$0xff]
          %v677 = vld [vmem:[#allocation2 + $0x30] sm:$0xff]
          %v678 = vld [vmem:[#allocation2 + $0x38] sm:$0xff]
          %v679 = vld [vmem:[#allocation2 + $0x40] sm:$0xff]
          %v680 = vld [vmem:[#allocation2 + $0x48] sm:$0xff]
          %v681 = vld [vmem:[#allocation2 + $0x50] sm:$0xff]
          %v682 = vld [vmem:[#allocation2 + $0x58] sm:$0xff]
          %v683 = vld [vmem:[#allocation2 + $0x60] sm:$0xff]
          %v684 = vld [vmem:[#allocation2 + $0x68] sm:$0xff]
          %v685 = vld [vmem:[#allocation2 + $0x70] sm:$0xff]
          %v686 = vld [vmem:[#allocation2 + $0x78] sm:$0xff]
          %v687 = vpack.c.bf16 %v672, %v671
          %v688 = vpack.c.bf16 %v674, %v673
          %v689 = vpack.c.bf16 %v676, %v675
          %v690 = vpack.c.bf16 %v678, %v677
          %v691 = vpack.c.bf16 %v680, %v679
          %v692 = vpack.c.bf16 %v682, %v681
          %v693 = vpack.c.bf16 %v684, %v683
          %v694 = vpack.c.bf16 %v686, %v685
          %v695 = vld [vmem:[%s374] sm:$0xf]
          %v696 = vld [vmem:[%s374 + $0x4] sm:$0xf]
          %v697 = vld [vmem:[%s374 + $0x8] sm:$0xf]
          %v698 = vld [vmem:[%s374 + $0xc] sm:$0xf]
          %v699 = vld [vmem:[%s374 + $0x10] sm:$0xf]
          %v700 = vld [vmem:[%s374 + $0x14] sm:$0xf]
          %v701 = vld [vmem:[%s374 + $0x18] sm:$0xf]
          %v702 = vld [vmem:[%s374 + $0x1c] sm:$0xf]
          %v703 = vld [vmem:[%s374 + $0x20] sm:$0xf]
          %v704 = vld [vmem:[%s374 + $0x24] sm:$0xf]
          %v705 = vld [vmem:[%s374 + $0x28] sm:$0xf]
          %v706 = vld [vmem:[%s374 + $0x2c] sm:$0xf]
          %v707 = vld [vmem:[%s374 + $0x30] sm:$0xf]
          %v708 = vld [vmem:[%s374 + $0x34] sm:$0xf]
          %v709 = vld [vmem:[%s374 + $0x38] sm:$0xf]
          %v710 = vld [vmem:[%s374 + $0x3c] sm:$0xf]
          %v711 = vld [vmem:[#allocation13] sm:$0xf]
          %v712 = vld [vmem:[#allocation13 + $0x4] sm:$0xf]
          %v713 = vld [vmem:[#allocation13 + $0x8] sm:$0xf]
          %v714 = vld [vmem:[#allocation13 + $0xc] sm:$0xf]
          %v715 = vld [vmem:[#allocation13 + $0x10] sm:$0xf]
          %v716 = vld [vmem:[#allocation13 + $0x14] sm:$0xf]
          %v717 = vld [vmem:[#allocation13 + $0x18] sm:$0xf]
          %v718 = vld [vmem:[#allocation13 + $0x1c] sm:$0xf]
          %v719 = vld [vmem:[#allocation13 + $0x20] sm:$0xf]
          %v720 = vld [vmem:[#allocation13 + $0x24] sm:$0xf]
          %v721 = vld [vmem:[#allocation13 + $0x28] sm:$0xf]
          %v722 = vld [vmem:[#allocation13 + $0x2c] sm:$0xf]
          %v723 = vld [vmem:[#allocation13 + $0x30] sm:$0xf]
          %v724 = vld [vmem:[#allocation13 + $0x34] sm:$0xf]
          %v725 = vld [vmem:[#allocation13 + $0x38] sm:$0xf]
          %v726 = vld [vmem:[#allocation13 + $0x3c] sm:$0xf]
          %v727 = vld [vmem:[#allocation15] sm:$0xf]
          %v728 = vld [vmem:[#allocation15 + $0x4] sm:$0xf]
          %v729 = vld [vmem:[#allocation15 + $0x8] sm:$0xf]
          %v730 = vld [vmem:[#allocation15 + $0xc] sm:$0xf]
          %v731 = vld [vmem:[#allocation15 + $0x10] sm:$0xf]
          %v732 = vld [vmem:[#allocation15 + $0x14] sm:$0xf]
          %v733 = vld [vmem:[#allocation15 + $0x18] sm:$0xf]
          %v734 = vld [vmem:[#allocation15 + $0x1c] sm:$0xf]
          %v735 = vld [vmem:[#allocation15 + $0x20] sm:$0xf]
          %v736 = vld [vmem:[#allocation15 + $0x24] sm:$0xf]
          %v737 = vld [vmem:[#allocation15 + $0x28] sm:$0xf]
          %v738 = vld [vmem:[#allocation15 + $0x2c] sm:$0xf]
          %v739 = vld [vmem:[#allocation15 + $0x30] sm:$0xf]
          %v740 = vld [vmem:[#allocation15 + $0x34] sm:$0xf]
          %v741 = vld [vmem:[#allocation15 + $0x38] sm:$0xf]
          %v742 = vld [vmem:[#allocation15 + $0x3c] sm:$0xf]
          %v759 = vunpack.c.l.b16 %v727
          %v760 = vunpack.c.l.b16 %v728
          %v761 = vunpack.c.l.b16 %v729
          %v762 = vunpack.c.l.b16 %v730
          %v763 = vunpack.c.l.b16 %v731
          %v764 = vunpack.c.l.b16 %v732
          %v765 = vunpack.c.l.b16 %v733
          %v766 = vunpack.c.l.b16 %v734
          %v767 = vunpack.c.l.b16 %v735
          %v768 = vunpack.c.l.b16 %v736
          %v769 = vunpack.c.l.b16 %v737
          %v770 = vunpack.c.l.b16 %v738
          %v771 = vunpack.c.l.b16 %v739
          %v772 = vunpack.c.l.b16 %v740
          %v773 = vunpack.c.l.b16 %v741
          %v774 = vunpack.c.l.b16 %v742
          %v775 = vpack.c.b16 %v760, %v759
          %v776 = vpack.c.b16 %v762, %v761
          %v777 = vpack.c.b16 %v764, %v763
          %v778 = vpack.c.b16 %v766, %v765
          %v779 = vpack.c.b16 %v768, %v767
          %v780 = vpack.c.b16 %v770, %v769
          %v781 = vpack.c.b16 %v772, %v771
          %v782 = vpack.c.b16 %v774, %v773
          %791 = vmatpush.bf16.msra.mxu0 %v782
          %792 = vmatpush.bf16.msra.mxu0 %v781
          %793 = vmatpush.bf16.msra.mxu0 %v780
          %794 = vmatpush.bf16.msra.mxu0 %v779
          %795 = vmatpush.bf16.msra.mxu0 %v778
          %796 = vmatpush.bf16.msra.mxu0 %v777
          %797 = vmatpush.bf16.msra.mxu0 %v776
          %798 = vmatpush.bf16.msra.mxu0 %v775
          %799 = vmatmul.bf16.gmra.mxu0 %v687
          %v800 = vpop.f32.mrf.mxu0
          %v801 = vadd.f32 0.0, %v800
          %v802 = vpop.f32.mrf.mxu0
          %v803 = vadd.f32 0.0, %v802
          %804 = vmatmul.bf16.gmra.mxu0 %v688
          %v805 = vpop.f32.mrf.mxu0
          %v806 = vadd.f32 0.0, %v805
          %v807 = vpop.f32.mrf.mxu0
          %v808 = vadd.f32 0.0, %v807
          %809 = vmatmul.bf16.gmra.mxu0 %v689
          %v810 = vpop.f32.mrf.mxu0
          %v811 = vadd.f32 0.0, %v810
          %v812 = vpop.f32.mrf.mxu0
          %v813 = vadd.f32 0.0, %v812
          %814 = vmatmul.bf16.gmra.mxu0 %v690
          %v815 = vpop.f32.mrf.mxu0
          %v816 = vadd.f32 0.0, %v815
          %v817 = vpop.f32.mrf.mxu0
          %v818 = vadd.f32 0.0, %v817
          %819 = vmatmul.bf16.gmra.mxu0 %v691
          %v820 = vpop.f32.mrf.mxu0
          %v821 = vadd.f32 0.0, %v820
          %v822 = vpop.f32.mrf.mxu0
          %v823 = vadd.f32 0.0, %v822
          %824 = vmatmul.bf16.gmra.mxu0 %v692
          %v825 = vpop.f32.mrf.mxu0
          %v826 = vadd.f32 0.0, %v825
          %v827 = vpop.f32.mrf.mxu0
          %v828 = vadd.f32 0.0, %v827
          %829 = vmatmul.bf16.gmra.mxu0 %v693
          %v830 = vpop.f32.mrf.mxu0
          %v831 = vadd.f32 0.0, %v830
          %v832 = vpop.f32.mrf.mxu0
          %v833 = vadd.f32 0.0, %v832
          %834 = vmatmul.bf16.gmra.mxu0 %v694
          %v835 = vpop.f32.mrf.mxu0
          %v836 = vadd.f32 0.0, %v835
          %v837 = vpop.f32.mrf.mxu0
          %v838 = vadd.f32 0.0, %v837
          %839 = vdwg.mxu0
          %v856 = vunpack.c.l.b16 %v695
          %v857 = vunpack.c.l.b16 %v696
          %v858 = vunpack.c.l.b16 %v697
          %v859 = vunpack.c.l.b16 %v698
          %v860 = vunpack.c.l.b16 %v699
          %v861 = vunpack.c.l.b16 %v700
          %v862 = vunpack.c.l.b16 %v701
          %v863 = vunpack.c.l.b16 %v702
          %v864 = vunpack.c.l.b16 %v703
          %v865 = vunpack.c.l.b16 %v704
          %v866 = vunpack.c.l.b16 %v705
          %v867 = vunpack.c.l.b16 %v706
          %v868 = vunpack.c.l.b16 %v707
          %v869 = vunpack.c.l.b16 %v708
          %v870 = vunpack.c.l.b16 %v709
          %v871 = vunpack.c.l.b16 %v710
          %v872 = vpack.c.b16 %v857, %v856
          %v873 = vpack.c.b16 %v859, %v858
          %v874 = vpack.c.b16 %v861, %v860
          %v875 = vpack.c.b16 %v863, %v862
          %v876 = vpack.c.b16 %v865, %v864
          %v877 = vpack.c.b16 %v867, %v866
          %v878 = vpack.c.b16 %v869, %v868
          %v879 = vpack.c.b16 %v871, %v870
          %v904 = vunpack.c.l.b16 %v711
          %v905 = vunpack.c.l.b16 %v712
          %v906 = vunpack.c.l.b16 %v713
          %v907 = vunpack.c.l.b16 %v714
          %v908 = vunpack.c.l.b16 %v715
          %v909 = vunpack.c.l.b16 %v716
          %v910 = vunpack.c.l.b16 %v717
          %v911 = vunpack.c.l.b16 %v718
          %v912 = vunpack.c.l.b16 %v719
          %v913 = vunpack.c.l.b16 %v720
          %v914 = vunpack.c.l.b16 %v721
          %v915 = vunpack.c.l.b16 %v722
          %v916 = vunpack.c.l.b16 %v723
          %v917 = vunpack.c.l.b16 %v724
          %v918 = vunpack.c.l.b16 %v725
          %v919 = vunpack.c.l.b16 %v726
          %v920 = vpack.c.b16 %v905, %v904
          %v921 = vpack.c.b16 %v907, %v906
          %v922 = vpack.c.b16 %v909, %v908
          %v923 = vpack.c.b16 %v911, %v910
          %v924 = vpack.c.b16 %v913, %v912
          %v925 = vpack.c.b16 %v915, %v914
          %v926 = vpack.c.b16 %v917, %v916
          %v927 = vpack.c.b16 %v919, %v918
          %936 = vmatpush.bf16.msra.mxu0 %v927
          %937 = vmatpush.bf16.msra.mxu0 %v926
          %938 = vmatpush.bf16.msra.mxu0 %v925
          %939 = vmatpush.bf16.msra.mxu0 %v924
          %940 = vmatpush.bf16.msra.mxu0 %v923
          %941 = vmatpush.bf16.msra.mxu0 %v922
          %942 = vmatpush.bf16.msra.mxu0 %v921
          %943 = vmatpush.bf16.msra.mxu0 %v920
          %944 = vmatmul.bf16.gmra.mxu0 %v872
          %v945 = vpop.f32.mrf.mxu0
          %v946 = vadd.f32 %v801, %v945
          %v947 = vpop.f32.mrf.mxu0
          %v948 = vadd.f32 %v803, %v947
          %949 = vmatmul.bf16.gmra.mxu0 %v873
          %v950 = vpop.f32.mrf.mxu0
          %v951 = vadd.f32 %v806, %v950
          %v952 = vpop.f32.mrf.mxu0
          %v953 = vadd.f32 %v808, %v952
          %954 = vmatmul.bf16.gmra.mxu0 %v874
          %v955 = vpop.f32.mrf.mxu0
          %v956 = vadd.f32 %v811, %v955
          %v957 = vpop.f32.mrf.mxu0
          %v958 = vadd.f32 %v813, %v957
          %959 = vmatmul.bf16.gmra.mxu0 %v875
          %v960 = vpop.f32.mrf.mxu0
          %v961 = vadd.f32 %v816, %v960
          %v962 = vpop.f32.mrf.mxu0
          %v963 = vadd.f32 %v818, %v962
          %964 = vmatmul.bf16.gmra.mxu0 %v876
          %v965 = vpop.f32.mrf.mxu0
          %v966 = vadd.f32 %v821, %v965
          %v967 = vpop.f32.mrf.mxu0
          %v968 = vadd.f32 %v823, %v967
          %969 = vmatmul.bf16.gmra.mxu0 %v877
          %v970 = vpop.f32.mrf.mxu0
          %v971 = vadd.f32 %v826, %v970
          %v972 = vpop.f32.mrf.mxu0
          %v973 = vadd.f32 %v828, %v972
          %974 = vmatmul.bf16.gmra.mxu0 %v878
          %v975 = vpop.f32.mrf.mxu0
          %v976 = vadd.f32 %v831, %v975
          %v977 = vpop.f32.mrf.mxu0
          %v978 = vadd.f32 %v833, %v977
          %979 = vmatmul.bf16.gmra.mxu0 %v879
          %v980 = vpop.f32.mrf.mxu0
          %v981 = vadd.f32 %v836, %v980
          %v982 = vpop.f32.mrf.mxu0
          %v983 = vadd.f32 %v838, %v982
          %984 = vdwg.mxu0
          %v985 = vld [vmem:[%s8] sm:$0x1]
          %v987 = vperm.slane %v985, 0
          %v989 = vadd.f32 %v946, %v987
          %v990 = vadd.f32 %v948, %v987
          %v991 = vadd.f32 %v951, %v987
          %v992 = vadd.f32 %v953, %v987
          %v993 = vadd.f32 %v956, %v987
          %v994 = vadd.f32 %v958, %v987
          %v995 = vadd.f32 %v961, %v987
          %v996 = vadd.f32 %v963, %v987
          %v997 = vadd.f32 %v966, %v987
          %v998 = vadd.f32 %v968, %v987
          %v999 = vadd.f32 %v971, %v987
          %v1000 = vadd.f32 %v973, %v987
          %v1001 = vadd.f32 %v976, %v987
          %v1002 = vadd.f32 %v978, %v987
          %v1003 = vadd.f32 %v981, %v987
          %v1004 = vadd.f32 %v983, %v987
          %v1005 = vmax.f32 %v989, 0.0
          %v1006 = vmax.f32 %v990, 0.0
          %v1007 = vmax.f32 %v991, 0.0
          %v1008 = vmax.f32 %v992, 0.0
          %v1009 = vmax.f32 %v993, 0.0
          %v1010 = vmax.f32 %v994, 0.0
          %v1011 = vmax.f32 %v995, 0.0
          %v1012 = vmax.f32 %v996, 0.0
          %v1013 = vmax.f32 %v997, 0.0
          %v1014 = vmax.f32 %v998, 0.0
          %v1015 = vmax.f32 %v999, 0.0
          %v1016 = vmax.f32 %v1000, 0.0
          %v1017 = vmax.f32 %v1001, 0.0
          %v1018 = vmax.f32 %v1002, 0.0
          %v1019 = vmax.f32 %v1003, 0.0
          %v1020 = vmax.f32 %v1004, 0.0
          %v1021 = vlaneseq
          %v1022 = vshrl.u32 %v1021, 7
          %v1023 = vadd.s32 %v1022, 8
          %v1024 = vadd.s32 %v1022, 16
          %v1025 = vadd.s32 %v1022, 24
          %v1026 = vadd.s32 %v1022, 32
          %v1027 = vadd.s32 %v1022, 40
          %v1028 = vadd.s32 %v1022, 48
          %v1029 = vadd.s32 %v1022, 56
          %v1030 = vadd.s32 %v1022, 64
          %v1031 = vadd.s32 %v1022, 72
          %v1032 = vadd.s32 %v1022, 80
          %v1033 = vadd.s32 %v1022, 88
          %v1034 = vadd.s32 %v1022, 96
          %v1035 = vadd.s32 %v1022, 104
          %v1036 = vadd.s32 %v1022, 112
          %v1037 = vadd.s32 %v1022, 120
          %s1038 = smul.u32 %s434, 128
          %v1039 = vstv %s1038
          %v1040 = vadd.s32 %v1022, %v1039
          %v1041 = vadd.s32 %v1023, %v1039
          %v1042 = vadd.s32 %v1024, %v1039
          %v1043 = vadd.s32 %v1025, %v1039
          %v1044 = vadd.s32 %v1026, %v1039
          %v1045 = vadd.s32 %v1027, %v1039
          %v1046 = vadd.s32 %v1028, %v1039
          %v1047 = vadd.s32 %v1029, %v1039
          %v1048 = vadd.s32 %v1030, %v1039
          %v1049 = vadd.s32 %v1031, %v1039
          %v1050 = vadd.s32 %v1032, %v1039
          %v1051 = vadd.s32 %v1033, %v1039
          %v1052 = vadd.s32 %v1034, %v1039
          %v1053 = vadd.s32 %v1035, %v1039
          %v1054 = vadd.s32 %v1036, %v1039
          %v1055 = vadd.s32 %v1037, %v1039
          %vm1056 = vcmp.lt.s32.totalorder %v1040, 16
          %vm1057 = vcmp.lt.s32.totalorder %v1041, 16
          %vm1058 = vcmp.lt.s32.totalorder %v1042, 16
          %vm1059 = vcmp.lt.s32.totalorder %v1043, 16
          %vm1060 = vcmp.lt.s32.totalorder %v1044, 16
          %vm1061 = vcmp.lt.s32.totalorder %v1045, 16
          %vm1062 = vcmp.lt.s32.totalorder %v1046, 16
          %vm1063 = vcmp.lt.s32.totalorder %v1047, 16
          %vm1064 = vcmp.lt.s32.totalorder %v1048, 16
          %vm1065 = vcmp.lt.s32.totalorder %v1049, 16
          %vm1066 = vcmp.lt.s32.totalorder %v1050, 16
          %vm1067 = vcmp.lt.s32.totalorder %v1051, 16
          %vm1068 = vcmp.lt.s32.totalorder %v1052, 16
          %vm1069 = vcmp.lt.s32.totalorder %v1053, 16
          %vm1070 = vcmp.lt.s32.totalorder %v1054, 16
          %vm1071 = vcmp.lt.s32.totalorder %v1055, 16
          %v1072 = vsel %vm1056, %v1005, 0.0
          %v1073 = vsel %vm1057, %v1006, 0.0
          %v1074 = vsel %vm1058, %v1007, 0.0
          %v1075 = vsel %vm1059, %v1008, 0.0
          %v1076 = vsel %vm1060, %v1009, 0.0
          %v1077 = vsel %vm1061, %v1010, 0.0
          %v1078 = vsel %vm1062, %v1011, 0.0
          %v1079 = vsel %vm1063, %v1012, 0.0
          %v1080 = vsel %vm1064, %v1013, 0.0
          %v1081 = vsel %vm1065, %v1014, 0.0
          %v1082 = vsel %vm1066, %v1015, 0.0
          %v1083 = vsel %vm1067, %v1016, 0.0
          %v1084 = vsel %vm1068, %v1017, 0.0
          %v1085 = vsel %vm1069, %v1018, 0.0
          %v1086 = vsel %vm1070, %v1019, 0.0
          %v1087 = vsel %vm1071, %v1020, 0.0
          %v1088 = vpack.c.bf16 %v1072, %v1072
          %v1089 = vpack.c.bf16 %v1073, %v1073
          %v1090 = vpack.c.bf16 %v1074, %v1074
          %v1091 = vpack.c.bf16 %v1075, %v1075
          %v1092 = vpack.c.bf16 %v1076, %v1076
          %v1093 = vpack.c.bf16 %v1077, %v1077
          %v1094 = vpack.c.bf16 %v1078, %v1078
          %v1095 = vpack.c.bf16 %v1079, %v1079
          %v1096 = vpack.c.bf16 %v1080, %v1080
          %v1097 = vpack.c.bf16 %v1081, %v1081
          %v1098 = vpack.c.bf16 %v1082, %v1082
          %v1099 = vpack.c.bf16 %v1083, %v1083
          %v1100 = vpack.c.bf16 %v1084, %v1084
          %v1101 = vpack.c.bf16 %v1085, %v1085
          %v1102 = vpack.c.bf16 %v1086, %v1086
          %v1103 = vpack.c.bf16 %v1087, %v1087
          %1104 = vst [vmem:[%s423] sm:$0xf] %v1088
          %1105 = vst [vmem:[%s423 + $0x4] sm:$0xf] %v1089
          %1106 = vst [vmem:[%s423 + $0x8] sm:$0xf] %v1090
          %1107 = vst [vmem:[%s423 + $0xc] sm:$0xf] %v1091
          %1108 = vst [vmem:[%s423 + $0x10] sm:$0xf] %v1092
          %1109 = vst [vmem:[%s423 + $0x14] sm:$0xf] %v1093
          %1110 = vst [vmem:[%s423 + $0x18] sm:$0xf] %v1094
          %1111 = vst [vmem:[%s423 + $0x1c] sm:$0xf] %v1095
          %1112 = vst [vmem:[%s423 + $0x20] sm:$0xf] %v1096
          %1113 = vst [vmem:[%s423 + $0x24] sm:$0xf] %v1097
          %1114 = vst [vmem:[%s423 + $0x28] sm:$0xf] %v1098
          %1115 = vst [vmem:[%s423 + $0x2c] sm:$0xf] %v1099
          %1116 = vst [vmem:[%s423 + $0x30] sm:$0xf] %v1100
          %1117 = vst [vmem:[%s423 + $0x34] sm:$0xf] %v1101
          %1118 = vst [vmem:[%s423 + $0x38] sm:$0xf] %v1102
          %1119 = vst [vmem:[%s423 + $0x3c] sm:$0xf] %v1103
        $region76: #{tpu_custom_call.1} parent=43 // pred_fallthru
          _
        %s1120 = sand.u32 %s209, 1
        %s1121 = scalar_lea.sflag [#allocation9], %s1120
        %s1122 = sand.u32 %s209, 1
        %s1123 = smul.addr %s1122, 64
        %s1124 = scalar_lea.vmem [#allocation16], %s1123
        // Predicated region
        $region77: #{tpu_custom_call.1} parent=43 // pred_check
          %p1125 = pneg %p219
        $region78: #{tpu_custom_call.1} parent=43 // pred_check_branch
          %1127 = sbr.rel (%p1125) target = $region80
        $region79: #{tpu_custom_call.1} parent=43 // pred_region
          %s1128 = sld [smem:[#allocation4 + %s48]]
          %s1129 = smul.u32 16, %s1128
          %1131 = vsyncadd %s1121, 0
          %s1132 = smul.addr %s1129, 4
          %s1133 = scalar_lea.hbm %s9, %s1132
          %s1134 = sshll.u32 %s1124, 4
          %s1135 = int_to_ptr.vmem [resolvable:$true] %s1134
          %s1136 = sshll.u32 %s1133, 4
          %s1137 = int_to_ptr.hbm [resolvable:$true] %s1136
          %1142 = dma.vmem_to_hbm [thread:$0]  %s1135, 1024, %s1137, %s1121, 64, 64, 4
        $region80: #{tpu_custom_call.1} parent=43 // pred_fallthru
          _
      $region44: #{tpu_custom_call.1} parent=5 // pred_fallthru
        _
      %p1143 = scmp.le.s32.totalorder 2, %s43
      // Predicated region
      $region81: #{tpu_custom_call.1} parent=5 // pred_check
        %p1144 = pneg %p1143
      $region82: #{tpu_custom_call.1} parent=5 // pred_check_branch
        %1146 = sbr.rel (%p1144) target = $region84
      $region83: #{tpu_custom_call.1} parent=5 // pred_region
        %s1147 = ssub.s32 %s43, 2
        // Predicated region
        $region85: #{tpu_custom_call.1} parent=83 // pred_check
          %p1148 = pneg %p225
        $region86: #{tpu_custom_call.1} parent=83 // pred_check_branch
          %1150 = sbr.rel (%p1148) target = $region88
        $region87: #{tpu_custom_call.1} parent=83 // pred_region
          %s1151 = sand.u32 %s210, 1
          %s1152 = scalar_lea.sflag [#allocation9], %s1151
          %s1153 = sand.u32 %s210, 1
          %s1154 = smul.addr %s1153, 64
          %s1155 = scalar_lea.vmem [#allocation16], %s1154
          %1157 = dma.done %s1152, 1024
        $region88: #{tpu_custom_call.1} parent=83 // pred_fallthru
          _
      $region84: #{tpu_custom_call.1} parent=5 // pred_fallthru
        _
    $region6: #{tpu_custom_call.1} parent=1 // loop_footer
      %s47 = sadd.s32 1, %s43
    $region7: #{tpu_custom_call.1} parent=1 // loop_footer_branch
      %42 = sbr.rel target = $region3
    $region8: #{tpu_custom_call.1} parent=1 // loop_exit
      _
    %1158 = vsyncpa [#allocation8], 1
    %s1159 = scalar_lea.sflag [#allocation8], 1
    %1160 = vsyncpa %s1159, 1
    %1161 = vsyncpa [#allocation11], 1
    %s1162 = scalar_lea.sflag [#allocation11], 1
    %1163 = vsyncpa %s1162, 1
    %1164 = vsyncpa [#allocation14], 1
    %1165 = vsyncpa [#allocation9], 1
    %s1166 = scalar_lea.sflag [#allocation9], 1
    %1167 = vsyncpa %s1166, 1

</llo_original>
